<compile_context>
chip_gen: v7x
topology: tpu7x:2x2x1
jax: 0.10.0
libtpu: 0.0.40
codegen_flags: <defaults>
</compile_context>

<pallas_src>
import jax
import jax.numpy as jnp
from jax import lax
from jax.experimental import pallas as pl
from jax.experimental.pallas import tpu as pltpu

EPS = 1e-5  # nn.BatchNorm1d default


# ---------------- Pallas kernels ----------------

def linear_stats_kernel(x_ref, w_ref, y_ref, stats_ref):
    """y1 = x @ W1^T (bf16 MXU operands, f32 acc), bf16 writeback,
    plus per-tile BN partial sums (from the f32 accumulator)."""
    y = jnp.dot(x_ref[...].astype(jnp.bfloat16), w_ref[...],
                preferred_element_type=jnp.float32)
    y_ref[...] = y.astype(y_ref.dtype)            # bf16 intermediate to HBM
    c = y.shape[-1]
    stats_ref[...] = jnp.concatenate(             # one full (8, C) store
        [jnp.sum(y, axis=0, keepdims=True),
         jnp.sum(y * y, axis=0, keepdims=True),
         jnp.zeros((6, c), jnp.float32)], axis=0)


def bn_relu_linear_stats_kernel(y1_ref, sc_ref, sh_ref, w_ref, y2_ref, stats_ref):
    """BN1 (precomputed scale/shift FMA, f32) + ReLU + Linear2 (bf16 MXU) +
    BN2 per-tile partial sums."""
    h = jnp.maximum(y1_ref[...].astype(jnp.float32) * sc_ref[...] + sh_ref[...], 0.0)
    y2 = jnp.dot(h.astype(jnp.bfloat16), w_ref[...],
                 preferred_element_type=jnp.float32)
    y2_ref[...] = y2
    d = y2.shape[-1]
    stats_ref[...] = jnp.concatenate(
        [jnp.sum(y2, axis=0, keepdims=True),
         jnp.sum(y2 * y2, axis=0, keepdims=True),
         jnp.zeros((6, d), jnp.float32)], axis=0)


def bn_affine_kernel(y2_ref, sc_ref, sh_ref, o_ref):
    """Final BN2 normalization: one FMA per element."""
    o_ref[...] = y2_ref[...] * sc_ref[...] + sh_ref[...]


# ---------------- glue ----------------

def _bn_scale_shift(partial_stats, num_tiles, batch, gamma, beta):
    """Finalize training-mode BN stats from per-tile partials (tiny arrays)."""
    st = partial_stats.reshape(num_tiles, 8, -1)
    s = jnp.sum(st[:, 0, :], axis=0)
    ss = jnp.sum(st[:, 1, :], axis=0)
    mean = s / batch
    var = jnp.maximum(ss / batch - mean * mean, 0.0)   # biased var (PyTorch fwd)
    scale = gamma * lax.rsqrt(var + EPS)
    shift = beta - mean * scale
    return scale[None, :], shift[None, :]


def _pick_tile(batch, cap):
    """Single step for small batches; else largest multiple-of-8 divisor <= cap."""
    if batch <= cap:
        return batch
    t = cap - cap % 8
    while t >= 8:
        if batch % t == 0:
            return t
        t -= 8
    return batch


def _vmem_limit_bytes():
    # v7x: 64 MiB VMEM per TensorCore; v5e/v6e: 128 MiB. Leave headroom for
    # Mosaic internal scratch.
    try:
        phys = pltpu.get_tpu_info().vmem_capacity_bytes
    except Exception:
        phys = 64 * 1024 * 1024
    return int(min(phys - 16 * 1024 * 1024, 100 * 1024 * 1024))


def prepare_params(params):
    """One-time weight repack (keep OUT of the per-forward/jit path):
    PyTorch (out, in) Linear weights -> matmul layout, bf16 for the MXU.
    Linear biases b1/b2 are intentionally dropped: a bias immediately before
    training-mode BatchNorm cancels exactly in the normalization."""
    return {
        "w1": params["w1"].T.astype(jnp.bfloat16),       # (C, C)
        "w2": params["w2"].T.astype(jnp.bfloat16),       # (C, D)
        "g1": params["g1"].astype(jnp.float32),
        "beta1": params["beta1"].astype(jnp.float32),
        "g2": params["g2"].astype(jnp.float32),
        "beta2": params["beta2"].astype(jnp.float32),
    }


# ---------------- wrapper ----------------

def projection_mlp_forward(x, prepared, *, tile_b=None, single_buffer_invariants=True):
    B, C = x.shape
    w1, w2 = prepared["w1"], prepared["w2"]
    D = w2.shape[1]
    assert w1.shape == (C, C) and w2.shape == (C, D)
    assert C % 128 == 0 and D % 128 == 0, "channel dims must be 128-lane aligned"

    if tile_b is None:
        # Cap row tile at 512 for C=2048 so the double-buffered working set fits
        # v7x's 64 MiB-per-TC VMEM; allow 1024 rows for C=512.
        tile_b = _pick_tile(B, 512 if C > 1024 else 1024)
    assert B % tile_b == 0 and (tile_b == B or tile_b % 8 == 0)
    nt = B // tile_b

    cp = pltpu.CompilerParams(dimension_semantics=("parallel",),
                              vmem_limit_bytes=_vmem_limit_bytes())

    use_sb = single_buffer_invariants and hasattr(pl, "Buffered")

    def inv(shape):
        # Grid-invariant operand (index_map constant): single-buffer it to save
        # VMEM when this Pallas build supports pipeline_mode.
        if use_sb:
            return pl.BlockSpec(shape, lambda i: (0, 0), pipeline_mode=pl.Buffered(1))
        return pl.BlockSpec(shape, lambda i: (0, 0))

    # Stage 1: Linear1 (bf16 MXU) + BN1 partial statistics; y1 stored as bf16.
    y1, st1 = pl.pallas_call(
        linear_stats_kernel,
        grid=(nt,),
        in_specs=[pl.BlockSpec((tile_b, C), lambda i: (i, 0)),
                  inv((C, C))],
        out_specs=[pl.BlockSpec((tile_b, C), lambda i: (i, 0)),
                   pl.BlockSpec((8, C), lambda i: (i, 0))],
        out_shape=[jax.ShapeDtypeStruct((B, C), jnp.bfloat16),
                   jax.ShapeDtypeStruct((nt * 8, C), jnp.float32)],
        compiler_params=cp,
    )(x, w1)

    scale1, shift1 = _bn_scale_shift(st1, nt, B, prepared["g1"], prepared["beta1"])

    # Stage 2: BN1 (FMA) + ReLU + Linear2 + BN2 partial statistics.
    y2, st2 = pl.pallas_call(
        bn_relu_linear_stats_kernel,
        grid=(nt,),
        in_specs=[pl.BlockSpec((tile_b, C), lambda i: (i, 0)),
                  inv((1, C)),
                  inv((1, C)),
                  inv((C, D))],
        out_specs=[pl.BlockSpec((tile_b, D), lambda i: (i, 0)),
                   pl.BlockSpec((8, D), lambda i: (i, 0))],
        out_shape=[jax.ShapeDtypeStruct((B, D), jnp.float32),
                   jax.ShapeDtypeStruct((nt * 8, D), jnp.float32)],
        compiler_params=cp,
    )(y1, scale1, shift1, w2)

    scale2, shift2 = _bn_scale_shift(st2, nt, B, prepared["g2"], prepared["beta2"])

    # Stage 3: final BN2 FMA; row tile decoupled from tile_b (much larger blocks
    # for this tiny memory-bound pass); output aliases the y2 buffer.
    tile3 = _pick_tile(B, 8192)
    out = pl.pallas_call(
        bn_affine_kernel,
        grid=(B // tile3,),
        in_specs=[pl.BlockSpec((tile3, D), lambda i: (i, 0)),
                  inv((1, D)),
                  inv((1, D))],
        out_specs=pl.BlockSpec((tile3, D), lambda i: (i, 0)),
        out_shape=jax.ShapeDtypeStruct((B, D), jnp.float32),
        compiler_params=cp,
        input_output_aliases={0: 0},
    )(y2, scale2, shift2)

    return out


# -------- pure-JAX reference (PyTorch training-mode semantics, biases kept) --------

def reference_forward(x, params):
    def bn(h, g, b):
        m = h.mean(axis=0, keepdims=True)
        v = ((h - m) ** 2).mean(axis=0, keepdims=True)   # biased variance
        return (h - m) / jnp.sqrt(v + EPS) * g + b

    h = x @ params["w1"].T + params["b1"]
    h = jax.nn.relu(bn(h, params["g1"], params["beta1"]))
    h = h @ params["w2"].T + params["b2"]
    return bn(h, params["g2"], params["beta2"])


if __name__ == "__main__":
    # resnet18/34 encoder -> n_channels = 512, SimCLR projection dim = 128.
    B, C, D = 64, 512, 128

    key = jax.random.PRNGKey(0)
    kx, kw1, kb1, kg1, kB1, kw2, kb2, kg2, kB2 = jax.random.split(key, 9)

    lim = 1.0 / (C ** 0.5)   # PyTorch Linear default init scale
    x = jax.random.normal(kx, (B, C), jnp.float32)
    params = {
        "w1": jax.random.uniform(kw1, (C, C), jnp.float32, -lim, lim),
        "b1": jax.random.uniform(kb1, (C,), jnp.float32, -lim, lim),
        "g1": 1.0 + 0.1 * jax.random.normal(kg1, (C,), jnp.float32),
        "beta1": 0.1 * jax.random.normal(kB1, (C,), jnp.float32),
        "w2": jax.random.uniform(kw2, (D, C), jnp.float32, -lim, lim),
        "b2": jax.random.uniform(kb2, (D,), jnp.float32, -lim, lim),
        "g2": 1.0 + 0.1 * jax.random.normal(kg2, (D,), jnp.float32),
        "beta2": 0.1 * jax.random.normal(kB2, (D,), jnp.float32),
    }

    prepared = prepare_params(params)   # one-time weight repack, outside forward

    def run(tile_b=None):
        try:
            return projection_mlp_forward(x, prepared, tile_b=tile_b)
        except Exception:
            # This Pallas build may not accept single-buffered (pl.Buffered(1))
            # invariant operands; retry with default double buffering.
            return projection_mlp_forward(x, prepared, tile_b=tile_b,
                                          single_buffer_invariants=False)

    ref = jax.block_until_ready(reference_forward(x, params))

    # Default path: B=64 -> single grid step (no MXU under-fill, no tile overhead).
    out = jax.block_until_ready(run())
    assert out.shape == (B, D), out.shape
    max_err = float(jnp.max(jnp.abs(out - ref)))
    # bf16 MXU operands + bf16 y1 intermediate -> small deviation vs f32 reference.
    assert jnp.allclose(out, ref, atol=8e-2, rtol=8e-2), max_err

    # Forced multi-tile path: exercises the cross-tile BN partial-stats reduction.
    out_tiled = jax.block_until_ready(run(tile_b=32))
    max_err_t = float(jnp.max(jnp.abs(out_tiled - ref)))
    assert jnp.allclose(out_tiled, ref, atol=8e-2, rtol=8e-2), max_err_t

    print("KERNEL_OK")
</pallas_src>

<mosaic_0001>
module attributes {stable_mosaic.version = 11 : i64} {
  func.func @linear_stats_kernel(%arg0: i32, %arg1: memref<64x512xf32, #tpu.memory_space<vmem>>, %arg2: memref<512x512xbf16, #tpu.memory_space<vmem>>, %arg3: memref<64x512xbf16, #tpu.memory_space<vmem>>, %arg4: memref<8x512xf32, #tpu.memory_space<vmem>>) attributes {dimension_semantics = [#tpu.dimension_semantics<parallel>], iteration_bounds = array<i64: 1>, scalar_prefetch = 0 : i64, scratch_operands = 0 : i64, tpu.core_type = #tpu.core_type<tc>, window_params = [{transform_indices = @transform_0, window_bounds = array<i64: 64, 512>}, {pipeline_mode = #tpu.pipeline_mode<synchronous>, transform_indices = @transform_1, window_bounds = array<i64: 512, 512>}, {transform_indices = @transform_2, window_bounds = array<i64: 64, 512>}, {transform_indices = @transform_3, window_bounds = array<i64: 8, 512>}]} {
    %c0 = arith.constant 0 : index
    %c0_0 = arith.constant 0 : index
    %0 = vector.load %arg1[%c0, %c0_0] : memref<64x512xf32, #tpu.memory_space<vmem>>, vector<64x512xf32>
    %1 = arith.truncf %0 : vector<64x512xf32> to vector<64x512xbf16>
    %c0_1 = arith.constant 0 : index
    %c0_2 = arith.constant 0 : index
    %2 = vector.load %arg2[%c0_1, %c0_2] : memref<512x512xbf16, #tpu.memory_space<vmem>>, vector<512x512xbf16>
    %cst = arith.constant dense<0.000000e+00> : vector<64x512xf32>
    %3 = tpu.matmul %1, %2, %cst {dimension_numbers = #tpu.dot_dimension_numbers<[1], [0], [0], [1], [0, 0, 1, 1], [], []>} : vector<64x512xbf16>, vector<512x512xbf16>, vector<64x512xf32> -> vector<64x512xf32>
    %4 = arith.truncf %3 : vector<64x512xf32> to vector<64x512xbf16>
    %c0_3 = arith.constant 0 : index
    %c0_4 = arith.constant 0 : index
    %5 = vector.load %arg3[%c0_3, %c0_4] : memref<64x512xbf16, #tpu.memory_space<vmem>>, vector<64x512xbf16>
    tpu.vector_store %arg3[%c0_3, %c0_4], %4 {strides = array<i32>} : memref<64x512xbf16, #tpu.memory_space<vmem>>, vector<64x512xbf16>,
    %cst_5 = arith.constant dense<0.000000e+00> : vector<512xf32>
    %6 = vector.multi_reduction <add>, %3, %cst_5 [0] : vector<64x512xf32> to vector<512xf32>
    %7 = vector.shape_cast %6 : vector<512xf32> to vector<1x512xf32>
    %8 = arith.mulf %3, %3 : vector<64x512xf32>
    %cst_6 = arith.constant dense<0.000000e+00> : vector<512xf32>
    %9 = vector.multi_reduction <add>, %8, %cst_6 [0] : vector<64x512xf32> to vector<512xf32>
    %10 = vector.shape_cast %9 : vector<512xf32> to vector<1x512xf32>
    %cst_7 = arith.constant 0.000000e+00 : f32
    %11 = vector.broadcast %cst_7 : f32 to vector<6x512xf32>
    %12 = tpu.concatenate %7, %10, %11 in 0 : vector<1x512xf32>, vector<1x512xf32>, vector<6x512xf32> -> vector<8x512xf32>
    %c0_8 = arith.constant 0 : index
    %c0_9 = arith.constant 0 : index
    %13 = vector.load %arg4[%c0_8, %c0_9] : memref<8x512xf32, #tpu.memory_space<vmem>>, vector<8x512xf32>
    tpu.vector_store %arg4[%c0_8, %c0_9], %12 {strides = array<i32>} : memref<8x512xf32, #tpu.memory_space<vmem>>, vector<8x512xf32>,
    return
  }
  func.func @transform_0(%arg0: i32) -> (i32, i32) {
    %c0_i32 = arith.constant 0 : i32
    %c0_i32_0 = arith.constant 0 : i32
    return %arg0, %c0_i32 : i32, i32
  }
  func.func @transform_1(%arg0: i32) -> (i32, i32) {
    %c0_i32 = arith.constant 0 : i32
    %c0_i32_0 = arith.constant 0 : i32
    %c0_i32_1 = arith.constant 0 : i32
    return %c0_i32, %c0_i32_0 : i32, i32
  }
  func.func @transform_2(%arg0: i32) -> (i32, i32) {
    %c0_i32 = arith.constant 0 : i32
    %c0_i32_0 = arith.constant 0 : i32
    return %arg0, %c0_i32 : i32, i32
  }
  func.func @transform_3(%arg0: i32) -> (i32, i32) {
    %c0_i32 = arith.constant 0 : i32
    %c0_i32_0 = arith.constant 0 : i32
    return %arg0, %c0_i32 : i32, i32
  }
}

module attributes {stable_mosaic.version = 11 : i64} {
  func.func @linear_stats_kernel(%arg0: i32, %arg1: memref<64x512xf32, #tpu.memory_space<vmem>>, %arg2: memref<512x512xbf16, #tpu.memory_space<vmem>>, %arg3: memref<64x512xbf16, #tpu.memory_space<vmem>>, %arg4: memref<8x512xf32, #tpu.memory_space<vmem>>) attributes {dimension_semantics = [#tpu.dimension_semantics<parallel>], iteration_bounds = array<i64: 1>, scalar_prefetch = 0 : i64, scratch_operands = 0 : i64, tpu.core_type = #tpu.core_type<tc>, window_params = [{transform_indices = @transform_0, window_bounds = array<i64: 64, 512>}, {pipeline_mode = #tpu.pipeline_mode<synchronous>, transform_indices = @transform_1, window_bounds = array<i64: 512, 512>}, {transform_indices = @transform_2, window_bounds = array<i64: 64, 512>}, {transform_indices = @transform_3, window_bounds = array<i64: 8, 512>}]} {
    %c0 = arith.constant 0 : index
    %c0_0 = arith.constant 0 : index
    %0 = vector.load %arg1[%c0, %c0_0] : memref<64x512xf32, #tpu.memory_space<vmem>>, vector<64x512xf32>
    %1 = arith.truncf %0 : vector<64x512xf32> to vector<64x512xbf16>
    %c0_1 = arith.constant 0 : index
    %c0_2 = arith.constant 0 : index
    %2 = vector.load %arg2[%c0_1, %c0_2] : memref<512x512xbf16, #tpu.memory_space<vmem>>, vector<512x512xbf16>
    %cst = arith.constant dense<0.000000e+00> : vector<64x512xf32>
    %3 = tpu.matmul %1, %2, %cst {dimension_numbers = #tpu.dot_dimension_numbers<[1], [0], [0], [1], [0, 0, 1, 1], [], []>} : vector<64x512xbf16>, vector<512x512xbf16>, vector<64x512xf32> -> vector<64x512xf32>
    %4 = arith.truncf %3 : vector<64x512xf32> to vector<64x512xbf16>
    %c0_3 = arith.constant 0 : index
    %c0_4 = arith.constant 0 : index
    %5 = vector.load %arg3[%c0_3, %c0_4] : memref<64x512xbf16, #tpu.memory_space<vmem>>, vector<64x512xbf16>
    tpu.vector_store %arg3[%c0_3, %c0_4], %4 {strides = array<i32>} : memref<64x512xbf16, #tpu.memory_space<vmem>>, vector<64x512xbf16>,
    %cst_5 = arith.constant dense<0.000000e+00> : vector<512xf32>
    %6 = vector.multi_reduction <add>, %3, %cst_5 [0] : vector<64x512xf32> to vector<512xf32>
    %7 = vector.shape_cast %6 : vector<512xf32> to vector<1x512xf32>
    %8 = arith.mulf %3, %3 : vector<64x512xf32>
    %cst_6 = arith.constant dense<0.000000e+00> : vector<512xf32>
    %9 = vector.multi_reduction <add>, %8, %cst_6 [0] : vector<64x512xf32> to vector<512xf32>
    %10 = vector.shape_cast %9 : vector<512xf32> to vector<1x512xf32>
    %cst_7 = arith.constant 0.000000e+00 : f32
    %11 = vector.broadcast %cst_7 : f32 to vector<6x512xf32>
    %12 = tpu.concatenate %7, %10, %11 in 0 : vector<1x512xf32>, vector<1x512xf32>, vector<6x512xf32> -> vector<8x512xf32>
    %c0_8 = arith.constant 0 : index
    %c0_9 = arith.constant 0 : index
    %13 = vector.load %arg4[%c0_8, %c0_9] : memref<8x512xf32, #tpu.memory_space<vmem>>, vector<8x512xf32>
    tpu.vector_store %arg4[%c0_8, %c0_9], %12 {strides = array<i32>} : memref<8x512xf32, #tpu.memory_space<vmem>>, vector<8x512xf32>,
    return
  }
  func.func @transform_0(%arg0: i32) -> (i32, i32) {
    %c0_i32 = arith.constant 0 : i32
    %c0_i32_0 = arith.constant 0 : i32
    return %arg0, %c0_i32 : i32, i32
  }
  func.func @transform_1(%arg0: i32) -> (i32, i32) {
    %c0_i32 = arith.constant 0 : i32
    %c0_i32_0 = arith.constant 0 : i32
    %c0_i32_1 = arith.constant 0 : i32
    return %c0_i32, %c0_i32_0 : i32, i32
  }
  func.func @transform_2(%arg0: i32) -> (i32, i32) {
    %c0_i32 = arith.constant 0 : i32
    %c0_i32_0 = arith.constant 0 : i32
    return %arg0, %c0_i32 : i32, i32
  }
  func.func @transform_3(%arg0: i32) -> (i32, i32) {
    %c0_i32 = arith.constant 0 : i32
    %c0_i32_0 = arith.constant 0 : i32
    return %arg0, %c0_i32 : i32, i32
  }
}

</mosaic_0001>

<llo_original>
// kernel: tpu_custom_call.1
$region0: #{tpu_custom_call.1}
  #allocation0 [shape = 'u32[]', space=smem, size = 0x4, offset = 0x4, fixed_abs, tag = 'smem constant byte address 0x4 - core index']
  #allocation1 [shape = 'u32[144,128]{1,0:T(1,128)}', space=vmem, size = 0x12000, scoped, tag = 'internal scratch']
  %s0 = inlined_call_operand.hbm [shape: f32[64,512], index: 0, kind: input, shape index: {}]
  %s1 = inlined_call_operand.hbm [shape: bf16[512,512], index: 1, kind: input, shape index: {}]
  %s2 = inlined_call_operand.hbm [shape: bf16[64,512], index: 2, kind: output, shape index: {0}]
  %s3 = inlined_call_operand.hbm [shape: f32[8,512], index: 3, kind: output, shape index: {1}]
  %4 = xla_tuple %s2, %s3
  %s5 = sld [smem:[#allocation0]]
  $region34: #{tpu_custom_call.1} parent=0
    _
  %s7 = ssub.s32 1, %s5
  %s8 = scalar_select 0, %s7, %s5
  $region1: #{tpu_custom_call.1} parent=0
    #allocation2 [shape = 'u8[131072]{0}', space=vmem, size = 0x20000, scoped, tag = 'input window, operand 0, single buffered']
    #allocation3 [shape = 's32[1]{0}', space=sflag, size = 0x4, scoped, tag = 'scoped memory for tpu_custom_call.1']
    #allocation4 [shape = 's32[1]{0}', space=sflag, size = 0x4, scoped, tag = 'scoped memory for tpu_custom_call.1']
    #allocation5 [shape = 'u8[524288]{0}', space=vmem, size = 0x80000, scoped, tag = 'input window, operand 1, single buffered']
    #allocation6 [shape = 's32[1]{0}', space=sflag, size = 0x4, scoped, tag = 'scoped memory for tpu_custom_call.1']
    #allocation7 [shape = 'u8[65536]{0}', space=vmem, size = 0x10000, scoped, tag = 'output window, operand 0, single buffered']
    #allocation8 [shape = 'u8[16384]{0}', space=vmem, size = 0x4000, scoped, tag = 'output window, operand 1, single buffered']
    #allocation9 [shape = 's32[1]{0}', space=sflag, size = 0x4, scoped, tag = 'scoped memory for tpu_custom_call.1']
    %9 = vsyncpa [#allocation3], 0
    %10 = vsyncpa [#allocation6], 0
    %11 = vsyncpa [#allocation4], 0
    %12 = vsyncpa [#allocation9], 0
    // Predicated region
    $region2: #{tpu_custom_call.1} parent=1 // pred_check
      _
    $region3: #{tpu_custom_call.1} parent=1 // pred_check_branch
      %14 = sbr.rel (0) target = $region5
    $region4: #{tpu_custom_call.1} parent=1 // pred_region
      %s16 = ssub.s32 4096, 4096
      %17 = vsyncadd [#allocation3], %s16
      %s18 = sshll.u32 [#allocation2], 4
      %s19 = int_to_ptr.vmem [resolvable:$true] %s18
      %24 = dma.hbm_to_vmem [thread:$0]  %s0, 4096, %s19, [#allocation3], 512, 512, 32
    $region5: #{tpu_custom_call.1} parent=1 // pred_fallthru
      _
    // Predicated region
    $region6: #{tpu_custom_call.1} parent=1 // pred_check
      _
    $region7: #{tpu_custom_call.1} parent=1 // pred_check_branch
      %26 = sbr.rel (0) target = $region9
    $region8: #{tpu_custom_call.1} parent=1 // pred_region
      %s28 = ssub.s32 16384, 16384
      %29 = vsyncadd [#allocation6], %s28
      %s30 = sshll.u32 [#allocation5], 4
      %s31 = int_to_ptr.vmem [resolvable:$true] %s30
      %36 = dma.hbm_to_vmem [thread:$0]  %s1, 16384, %s31, [#allocation6], 256, 256, 16
    $region9: #{tpu_custom_call.1} parent=1 // pred_fallthru
      _
    // Predicated region
    $region10: #{tpu_custom_call.1} parent=1 // pred_check
      _
    $region11: #{tpu_custom_call.1} parent=1 // pred_check_branch
      %38 = sbr.rel (0) target = $region13
    $region12: #{tpu_custom_call.1} parent=1 // pred_region
      %39 = dma.done [#allocation3], 4096
    $region13: #{tpu_custom_call.1} parent=1 // pred_fallthru
      _
    // Predicated region
    $region14: #{tpu_custom_call.1} parent=1 // pred_check
      _
    $region15: #{tpu_custom_call.1} parent=1 // pred_check_branch
      %41 = sbr.rel (0) target = $region17
    $region16: #{tpu_custom_call.1} parent=1 // pred_region
      %42 = dma.done [#allocation6], 16384
    $region17: #{tpu_custom_call.1} parent=1 // pred_fallthru
      _
    %v43 = vld [vmem:[#allocation2] sm:$0xff]
    %v44 = vld [vmem:[#allocation2 + $0x8] sm:$0xff]
    %v45 = vld [vmem:[#allocation2 + $0x10] sm:$0xff]
    %v46 = vld [vmem:[#allocation2 + $0x18] sm:$0xff]
    %v47 = vld [vmem:[#allocation2 + $0x20] sm:$0xff]
    %v48 = vld [vmem:[#allocation2 + $0x28] sm:$0xff]
    %v49 = vld [vmem:[#allocation2 + $0x30] sm:$0xff]
    %v50 = vld [vmem:[#allocation2 + $0x38] sm:$0xff]
    %v51 = vld [vmem:[#allocation2 + $0x40] sm:$0xff]
    %v52 = vld [vmem:[#allocation2 + $0x48] sm:$0xff]
    %v53 = vld [vmem:[#allocation2 + $0x50] sm:$0xff]
    %v54 = vld [vmem:[#allocation2 + $0x58] sm:$0xff]
    %v55 = vld [vmem:[#allocation2 + $0x60] sm:$0xff]
    %v56 = vld [vmem:[#allocation2 + $0x68] sm:$0xff]
    %v57 = vld [vmem:[#allocation2 + $0x70] sm:$0xff]
    %v58 = vld [vmem:[#allocation2 + $0x78] sm:$0xff]
    %v59 = vld [vmem:[#allocation2 + $0x80] sm:$0xff]
    %v60 = vld [vmem:[#allocation2 + $0x88] sm:$0xff]
    %v61 = vld [vmem:[#allocation2 + $0x90] sm:$0xff]
    %v62 = vld [vmem:[#allocation2 + $0x98] sm:$0xff]
    %v63 = vld [vmem:[#allocation2 + $0xa0] sm:$0xff]
    %v64 = vld [vmem:[#allocation2 + $0xa8] sm:$0xff]
    %v65 = vld [vmem:[#allocation2 + $0xb0] sm:$0xff]
    %v66 = vld [vmem:[#allocation2 + $0xb8] sm:$0xff]
    %v67 = vld [vmem:[#allocation2 + $0xc0] sm:$0xff]
    %v68 = vld [vmem:[#allocation2 + $0xc8] sm:$0xff]
    %v69 = vld [vmem:[#allocation2 + $0xd0] sm:$0xff]
    %v70 = vld [vmem:[#allocation2 + $0xd8] sm:$0xff]
    %v71 = vld [vmem:[#allocation2 + $0xe0] sm:$0xff]
    %v72 = vld [vmem:[#allocation2 + $0xe8] sm:$0xff]
    %v73 = vld [vmem:[#allocation2 + $0xf0] sm:$0xff]
    %v74 = vld [vmem:[#allocation2 + $0xf8] sm:$0xff]
    %v75 = vpack.c.bf16 %v47, %v43
    %v76 = vpack.c.bf16 %v48, %v44
    %v77 = vpack.c.bf16 %v49, %v45
    %v78 = vpack.c.bf16 %v50, %v46
    %v79 = vpack.c.bf16 %v55, %v51
    %v80 = vpack.c.bf16 %v56, %v52
    %v81 = vpack.c.bf16 %v57, %v53
    %v82 = vpack.c.bf16 %v58, %v54
    %v83 = vpack.c.bf16 %v63, %v59
    %v84 = vpack.c.bf16 %v64, %v60
    %v85 = vpack.c.bf16 %v65, %v61
    %v86 = vpack.c.bf16 %v66, %v62
    %v87 = vpack.c.bf16 %v71, %v67
    %v88 = vpack.c.bf16 %v72, %v68
    %v89 = vpack.c.bf16 %v73, %v69
    %v90 = vpack.c.bf16 %v74, %v70
    %v91 = vld [vmem:[#allocation5] sm:$0xff]
    %v92 = vld [vmem:[#allocation5 + $0x8] sm:$0xff]
    %v93 = vld [vmem:[#allocation5 + $0x10] sm:$0xff]
    %v94 = vld [vmem:[#allocation5 + $0x18] sm:$0xff]
    %v95 = vld [vmem:[#allocation5 + $0x20] sm:$0xff]
    %v96 = vld [vmem:[#allocation5 + $0x28] sm:$0xff]
    %v97 = vld [vmem:[#allocation5 + $0x30] sm:$0xff]
    %v98 = vld [vmem:[#allocation5 + $0x38] sm:$0xff]
    %v99 = vld [vmem:[#allocation5 + $0x40] sm:$0xff]
    %v100 = vld [vmem:[#allocation5 + $0x48] sm:$0xff]
    %v101 = vld [vmem:[#allocation5 + $0x50] sm:$0xff]
    %v102 = vld [vmem:[#allocation5 + $0x58] sm:$0xff]
    %v103 = vld [vmem:[#allocation5 + $0x60] sm:$0xff]
    %v104 = vld [vmem:[#allocation5 + $0x68] sm:$0xff]
    %v105 = vld [vmem:[#allocation5 + $0x70] sm:$0xff]
    %v106 = vld [vmem:[#allocation5 + $0x78] sm:$0xff]
    %v107 = vld [vmem:[#allocation5 + $0x80] sm:$0xff]
    %v108 = vld [vmem:[#allocation5 + $0x88] sm:$0xff]
    %v109 = vld [vmem:[#allocation5 + $0x90] sm:$0xff]
    %v110 = vld [vmem:[#allocation5 + $0x98] sm:$0xff]
    %v111 = vld [vmem:[#allocation5 + $0xa0] sm:$0xff]
    %v112 = vld [vmem:[#allocation5 + $0xa8] sm:$0xff]
    %v113 = vld [vmem:[#allocation5 + $0xb0] sm:$0xff]
    %v114 = vld [vmem:[#allocation5 + $0xb8] sm:$0xff]
    %v115 = vld [vmem:[#allocation5 + $0xc0] sm:$0xff]
    %v116 = vld [vmem:[#allocation5 + $0xc8] sm:$0xff]
    %v117 = vld [vmem:[#allocation5 + $0xd0] sm:$0xff]
    %v118 = vld [vmem:[#allocation5 + $0xd8] sm:$0xff]
    %v119 = vld [vmem:[#allocation5 + $0xe0] sm:$0xff]
    %v120 = vld [vmem:[#allocation5 + $0xe8] sm:$0xff]
    %v121 = vld [vmem:[#allocation5 + $0xf0] sm:$0xff]
    %v122 = vld [vmem:[#allocation5 + $0xf8] sm:$0xff]
    %v123 = vld [vmem:[#allocation5 + $0x100] sm:$0xff]
    %v124 = vld [vmem:[#allocation5 + $0x108] sm:$0xff]
    %v125 = vld [vmem:[#allocation5 + $0x110] sm:$0xff]
    %v126 = vld [vmem:[#allocation5 + $0x118] sm:$0xff]
    %v127 = vld [vmem:[#allocation5 + $0x120] sm:$0xff]
    %v128 = vld [vmem:[#allocation5 + $0x128] sm:$0xff]
    %v129 = vld [vmem:[#allocation5 + $0x130] sm:$0xff]
    %v130 = vld [vmem:[#allocation5 + $0x138] sm:$0xff]
    %v131 = vld [vmem:[#allocation5 + $0x140] sm:$0xff]
    %v132 = vld [vmem:[#allocation5 + $0x148] sm:$0xff]
    %v133 = vld [vmem:[#allocation5 + $0x150] sm:$0xff]
    %v134 = vld [vmem:[#allocation5 + $0x158] sm:$0xff]
    %v135 = vld [vmem:[#allocation5 + $0x160] sm:$0xff]
    %v136 = vld [vmem:[#allocation5 + $0x168] sm:$0xff]
    %v137 = vld [vmem:[#allocation5 + $0x170] sm:$0xff]
    %v138 = vld [vmem:[#allocation5 + $0x178] sm:$0xff]
    %v139 = vld [vmem:[#allocation5 + $0x180] sm:$0xff]
    %v140 = vld [vmem:[#allocation5 + $0x188] sm:$0xff]
    %v141 = vld [vmem:[#allocation5 + $0x190] sm:$0xff]
    %v142 = vld [vmem:[#allocation5 + $0x198] sm:$0xff]
    %v143 = vld [vmem:[#allocation5 + $0x1a0] sm:$0xff]
    %v144 = vld [vmem:[#allocation5 + $0x1a8] sm:$0xff]
    %v145 = vld [vmem:[#allocation5 + $0x1b0] sm:$0xff]
    %v146 = vld [vmem:[#allocation5 + $0x1b8] sm:$0xff]
    %v147 = vld [vmem:[#allocation5 + $0x1c0] sm:$0xff]
    %v148 = vld [vmem:[#allocation5 + $0x1c8] sm:$0xff]
    %v149 = vld [vmem:[#allocation5 + $0x1d0] sm:$0xff]
    %v150 = vld [vmem:[#allocation5 + $0x1d8] sm:$0xff]
    %v151 = vld [vmem:[#allocation5 + $0x1e0] sm:$0xff]
    %v152 = vld [vmem:[#allocation5 + $0x1e8] sm:$0xff]
    %v153 = vld [vmem:[#allocation5 + $0x1f0] sm:$0xff]
    %v154 = vld [vmem:[#allocation5 + $0x1f8] sm:$0xff]
    %v155 = vld [vmem:[#allocation5 + $0x200] sm:$0xff]
    %v156 = vld [vmem:[#allocation5 + $0x208] sm:$0xff]
    %v157 = vld [vmem:[#allocation5 + $0x210] sm:$0xff]
    %v158 = vld [vmem:[#allocation5 + $0x218] sm:$0xff]
    %v159 = vld [vmem:[#allocation5 + $0x220] sm:$0xff]
    %v160 = vld [vmem:[#allocation5 + $0x228] sm:$0xff]
    %v161 = vld [vmem:[#allocation5 + $0x230] sm:$0xff]
    %v162 = vld [vmem:[#allocation5 + $0x238] sm:$0xff]
    %v163 = vld [vmem:[#allocation5 + $0x240] sm:$0xff]
    %v164 = vld [vmem:[#allocation5 + $0x248] sm:$0xff]
    %v165 = vld [vmem:[#allocation5 + $0x250] sm:$0xff]
    %v166 = vld [vmem:[#allocation5 + $0x258] sm:$0xff]
    %v167 = vld [vmem:[#allocation5 + $0x260] sm:$0xff]
    %v168 = vld [vmem:[#allocation5 + $0x268] sm:$0xff]
    %v169 = vld [vmem:[#allocation5 + $0x270] sm:$0xff]
    %v170 = vld [vmem:[#allocation5 + $0x278] sm:$0xff]
    %v171 = vld [vmem:[#allocation5 + $0x280] sm:$0xff]
    %v172 = vld [vmem:[#allocation5 + $0x288] sm:$0xff]
    %v173 = vld [vmem:[#allocation5 + $0x290] sm:$0xff]
    %v174 = vld [vmem:[#allocation5 + $0x298] sm:$0xff]
    %v175 = vld [vmem:[#allocation5 + $0x2a0] sm:$0xff]
    %v176 = vld [vmem:[#allocation5 + $0x2a8] sm:$0xff]
    %v177 = vld [vmem:[#allocation5 + $0x2b0] sm:$0xff]
    %v178 = vld [vmem:[#allocation5 + $0x2b8] sm:$0xff]
    %v179 = vld [vmem:[#allocation5 + $0x2c0] sm:$0xff]
    %v180 = vld [vmem:[#allocation5 + $0x2c8] sm:$0xff]
    %v181 = vld [vmem:[#allocation5 + $0x2d0] sm:$0xff]
    %v182 = vld [vmem:[#allocation5 + $0x2d8] sm:$0xff]
    %v183 = vld [vmem:[#allocation5 + $0x2e0] sm:$0xff]
    %v184 = vld [vmem:[#allocation5 + $0x2e8] sm:$0xff]
    %v185 = vld [vmem:[#allocation5 + $0x2f0] sm:$0xff]
    %v186 = vld [vmem:[#allocation5 + $0x2f8] sm:$0xff]
    %v187 = vld [vmem:[#allocation5 + $0x300] sm:$0xff]
    %v188 = vld [vmem:[#allocation5 + $0x308] sm:$0xff]
    %v189 = vld [vmem:[#allocation5 + $0x310] sm:$0xff]
    %v190 = vld [vmem:[#allocation5 + $0x318] sm:$0xff]
    %v191 = vld [vmem:[#allocation5 + $0x320] sm:$0xff]
    %v192 = vld [vmem:[#allocation5 + $0x328] sm:$0xff]
    %v193 = vld [vmem:[#allocation5 + $0x330] sm:$0xff]
    %v194 = vld [vmem:[#allocation5 + $0x338] sm:$0xff]
    %v195 = vld [vmem:[#allocation5 + $0x340] sm:$0xff]
    %v196 = vld [vmem:[#allocation5 + $0x348] sm:$0xff]
    %v197 = vld [vmem:[#allocation5 + $0x350] sm:$0xff]
    %v198 = vld [vmem:[#allocation5 + $0x358] sm:$0xff]
    %v199 = vld [vmem:[#allocation5 + $0x360] sm:$0xff]
    %v200 = vld [vmem:[#allocation5 + $0x368] sm:$0xff]
    %v201 = vld [vmem:[#allocation5 + $0x370] sm:$0xff]
    %v202 = vld [vmem:[#allocation5 + $0x378] sm:$0xff]
    %v203 = vld [vmem:[#allocation5 + $0x380] sm:$0xff]
    %v204 = vld [vmem:[#allocation5 + $0x388] sm:$0xff]
    %v205 = vld [vmem:[#allocation5 + $0x390] sm:$0xff]
    %v206 = vld [vmem:[#allocation5 + $0x398] sm:$0xff]
    %v207 = vld [vmem:[#allocation5 + $0x3a0] sm:$0xff]
    %v208 = vld [vmem:[#allocation5 + $0x3a8] sm:$0xff]
    %v209 = vld [vmem:[#allocation5 + $0x3b0] sm:$0xff]
    %v210 = vld [vmem:[#allocation5 + $0x3b8] sm:$0xff]
    %v211 = vld [vmem:[#allocation5 + $0x3c0] sm:$0xff]
    %v212 = vld [vmem:[#allocation5 + $0x3c8] sm:$0xff]
    %v213 = vld [vmem:[#allocation5 + $0x3d0] sm:$0xff]
    %v214 = vld [vmem:[#allocation5 + $0x3d8] sm:$0xff]
    %v215 = vld [vmem:[#allocation5 + $0x3e0] sm:$0xff]
    %v216 = vld [vmem:[#allocation5 + $0x3e8] sm:$0xff]
    %v217 = vld [vmem:[#allocation5 + $0x3f0] sm:$0xff]
    %v218 = vld [vmem:[#allocation5 + $0x3f8] sm:$0xff]
    %v347 = vunpack.c.l.b16 %v91
    %v348 = vunpack.c.h.b16 %v91
    %v349 = vunpack.c.l.b16 %v92
    %v350 = vunpack.c.h.b16 %v92
    %v351 = vunpack.c.l.b16 %v93
    %v352 = vunpack.c.h.b16 %v93
    %v353 = vunpack.c.l.b16 %v94
    %v354 = vunpack.c.h.b16 %v94
    %v355 = vunpack.c.l.b16 %v95
    %v356 = vunpack.c.h.b16 %v95
    %v357 = vunpack.c.l.b16 %v96
    %v358 = vunpack.c.h.b16 %v96
    %v359 = vunpack.c.l.b16 %v97
    %v360 = vunpack.c.h.b16 %v97
    %v361 = vunpack.c.l.b16 %v98
    %v362 = vunpack.c.h.b16 %v98
    %v363 = vunpack.c.l.b16 %v99
    %v364 = vunpack.c.h.b16 %v99
    %v365 = vunpack.c.l.b16 %v100
    %v366 = vunpack.c.h.b16 %v100
    %v367 = vunpack.c.l.b16 %v101
    %v368 = vunpack.c.h.b16 %v101
    %v369 = vunpack.c.l.b16 %v102
    %v370 = vunpack.c.h.b16 %v102
    %v371 = vunpack.c.l.b16 %v103
    %v372 = vunpack.c.h.b16 %v103
    %v373 = vunpack.c.l.b16 %v104
    %v374 = vunpack.c.h.b16 %v104
    %v375 = vunpack.c.l.b16 %v105
    %v376 = vunpack.c.h.b16 %v105
    %v377 = vunpack.c.l.b16 %v106
    %v378 = vunpack.c.h.b16 %v106
    %v379 = vunpack.c.l.b16 %v107
    %v380 = vunpack.c.h.b16 %v107
    %v381 = vunpack.c.l.b16 %v108
    %v382 = vunpack.c.h.b16 %v108
    %v383 = vunpack.c.l.b16 %v109
    %v384 = vunpack.c.h.b16 %v109
    %v385 = vunpack.c.l.b16 %v110
    %v386 = vunpack.c.h.b16 %v110
    %v387 = vunpack.c.l.b16 %v111
    %v388 = vunpack.c.h.b16 %v111
    %v389 = vunpack.c.l.b16 %v112
    %v390 = vunpack.c.h.b16 %v112
    %v391 = vunpack.c.l.b16 %v113
    %v392 = vunpack.c.h.b16 %v113
    %v393 = vunpack.c.l.b16 %v114
    %v394 = vunpack.c.h.b16 %v114
    %v395 = vunpack.c.l.b16 %v115
    %v396 = vunpack.c.h.b16 %v115
    %v397 = vunpack.c.l.b16 %v116
    %v398 = vunpack.c.h.b16 %v116
    %v399 = vunpack.c.l.b16 %v117
    %v400 = vunpack.c.h.b16 %v117
    %v401 = vunpack.c.l.b16 %v118
    %v402 = vunpack.c.h.b16 %v118
    %v403 = vunpack.c.l.b16 %v119
    %v404 = vunpack.c.h.b16 %v119
    %v405 = vunpack.c.l.b16 %v120
    %v406 = vunpack.c.h.b16 %v120
    %v407 = vunpack.c.l.b16 %v121
    %v408 = vunpack.c.h.b16 %v121
    %v409 = vunpack.c.l.b16 %v122
    %v410 = vunpack.c.h.b16 %v122
    %v411 = vunpack.c.l.b16 %v123
    %v412 = vunpack.c.h.b16 %v123
    %v413 = vunpack.c.l.b16 %v124
    %v414 = vunpack.c.h.b16 %v124
    %v415 = vunpack.c.l.b16 %v125
    %v416 = vunpack.c.h.b16 %v125
    %v417 = vunpack.c.l.b16 %v126
    %v418 = vunpack.c.h.b16 %v126
    %v419 = vunpack.c.l.b16 %v127
    %v420 = vunpack.c.h.b16 %v127
    %v421 = vunpack.c.l.b16 %v128
    %v422 = vunpack.c.h.b16 %v128
    %v423 = vunpack.c.l.b16 %v129
    %v424 = vunpack.c.h.b16 %v129
    %v425 = vunpack.c.l.b16 %v130
    %v426 = vunpack.c.h.b16 %v130
    %v427 = vunpack.c.l.b16 %v131
    %v428 = vunpack.c.h.b16 %v131
    %v429 = vunpack.c.l.b16 %v132
    %v430 = vunpack.c.h.b16 %v132
    %v431 = vunpack.c.l.b16 %v133
    %v432 = vunpack.c.h.b16 %v133
    %v433 = vunpack.c.l.b16 %v134
    %v434 = vunpack.c.h.b16 %v134
    %v435 = vunpack.c.l.b16 %v135
    %v436 = vunpack.c.h.b16 %v135
    %v437 = vunpack.c.l.b16 %v136
    %v438 = vunpack.c.h.b16 %v136
    %v439 = vunpack.c.l.b16 %v137
    %v440 = vunpack.c.h.b16 %v137
    %v441 = vunpack.c.l.b16 %v138
    %v442 = vunpack.c.h.b16 %v138
    %v443 = vunpack.c.l.b16 %v139
    %v444 = vunpack.c.h.b16 %v139
    %v445 = vunpack.c.l.b16 %v140
    %v446 = vunpack.c.h.b16 %v140
    %v447 = vunpack.c.l.b16 %v141
    %v448 = vunpack.c.h.b16 %v141
    %v449 = vunpack.c.l.b16 %v142
    %v450 = vunpack.c.h.b16 %v142
    %v451 = vunpack.c.l.b16 %v143
    %v452 = vunpack.c.h.b16 %v143
    %v453 = vunpack.c.l.b16 %v144
    %v454 = vunpack.c.h.b16 %v144
    %v455 = vunpack.c.l.b16 %v145
    %v456 = vunpack.c.h.b16 %v145
    %v457 = vunpack.c.l.b16 %v146
    %v458 = vunpack.c.h.b16 %v146
    %v459 = vunpack.c.l.b16 %v147
    %v460 = vunpack.c.h.b16 %v147
    %v461 = vunpack.c.l.b16 %v148
    %v462 = vunpack.c.h.b16 %v148
    %v463 = vunpack.c.l.b16 %v149
    %v464 = vunpack.c.h.b16 %v149
    %v465 = vunpack.c.l.b16 %v150
    %v466 = vunpack.c.h.b16 %v150
    %v467 = vunpack.c.l.b16 %v151
    %v468 = vunpack.c.h.b16 %v151
    %v469 = vunpack.c.l.b16 %v152
    %v470 = vunpack.c.h.b16 %v152
    %v471 = vunpack.c.l.b16 %v153
    %v472 = vunpack.c.h.b16 %v153
    %v473 = vunpack.c.l.b16 %v154
    %v474 = vunpack.c.h.b16 %v154
    %v475 = vunpack.c.l.b16 %v155
    %v476 = vunpack.c.h.b16 %v155
    %v477 = vunpack.c.l.b16 %v156
    %v478 = vunpack.c.h.b16 %v156
    %v479 = vunpack.c.l.b16 %v157
    %v480 = vunpack.c.h.b16 %v157
    %v481 = vunpack.c.l.b16 %v158
    %v482 = vunpack.c.h.b16 %v158
    %v483 = vunpack.c.l.b16 %v159
    %v484 = vunpack.c.h.b16 %v159
    %v485 = vunpack.c.l.b16 %v160
    %v486 = vunpack.c.h.b16 %v160
    %v487 = vunpack.c.l.b16 %v161
    %v488 = vunpack.c.h.b16 %v161
    %v489 = vunpack.c.l.b16 %v162
    %v490 = vunpack.c.h.b16 %v162
    %v491 = vunpack.c.l.b16 %v163
    %v492 = vunpack.c.h.b16 %v163
    %v493 = vunpack.c.l.b16 %v164
    %v494 = vunpack.c.h.b16 %v164
    %v495 = vunpack.c.l.b16 %v165
    %v496 = vunpack.c.h.b16 %v165
    %v497 = vunpack.c.l.b16 %v166
    %v498 = vunpack.c.h.b16 %v166
    %v499 = vunpack.c.l.b16 %v167
    %v500 = vunpack.c.h.b16 %v167
    %v501 = vunpack.c.l.b16 %v168
    %v502 = vunpack.c.h.b16 %v168
    %v503 = vunpack.c.l.b16 %v169
    %v504 = vunpack.c.h.b16 %v169
    %v505 = vunpack.c.l.b16 %v170
    %v506 = vunpack.c.h.b16 %v170
    %v507 = vunpack.c.l.b16 %v171
    %v508 = vunpack.c.h.b16 %v171
    %v509 = vunpack.c.l.b16 %v172
    %v510 = vunpack.c.h.b16 %v172
    %v511 = vunpack.c.l.b16 %v173
    %v512 = vunpack.c.h.b16 %v173
    %v513 = vunpack.c.l.b16 %v174
    %v514 = vunpack.c.h.b16 %v174
    %v515 = vunpack.c.l.b16 %v175
    %v516 = vunpack.c.h.b16 %v175
    %v517 = vunpack.c.l.b16 %v176
    %v518 = vunpack.c.h.b16 %v176
    %v519 = vunpack.c.l.b16 %v177
    %v520 = vunpack.c.h.b16 %v177
    %v521 = vunpack.c.l.b16 %v178
    %v522 = vunpack.c.h.b16 %v178
    %v523 = vunpack.c.l.b16 %v179
    %v524 = vunpack.c.h.b16 %v179
    %v525 = vunpack.c.l.b16 %v180
    %v526 = vunpack.c.h.b16 %v180
    %v527 = vunpack.c.l.b16 %v181
    %v528 = vunpack.c.h.b16 %v181
    %v529 = vunpack.c.l.b16 %v182
    %v530 = vunpack.c.h.b16 %v182
    %v531 = vunpack.c.l.b16 %v183
    %v532 = vunpack.c.h.b16 %v183
    %v533 = vunpack.c.l.b16 %v184
    %v534 = vunpack.c.h.b16 %v184
    %v535 = vunpack.c.l.b16 %v185
    %v536 = vunpack.c.h.b16 %v185
    %v537 = vunpack.c.l.b16 %v186
    %v538 = vunpack.c.h.b16 %v186
    %v539 = vunpack.c.l.b16 %v187
    %v540 = vunpack.c.h.b16 %v187
    %v541 = vunpack.c.l.b16 %v188
    %v542 = vunpack.c.h.b16 %v188
    %v543 = vunpack.c.l.b16 %v189
    %v544 = vunpack.c.h.b16 %v189
    %v545 = vunpack.c.l.b16 %v190
    %v546 = vunpack.c.h.b16 %v190
    %v547 = vunpack.c.l.b16 %v191
    %v548 = vunpack.c.h.b16 %v191
    %v549 = vunpack.c.l.b16 %v192
    %v550 = vunpack.c.h.b16 %v192
    %v551 = vunpack.c.l.b16 %v193
    %v552 = vunpack.c.h.b16 %v193
    %v553 = vunpack.c.l.b16 %v194
    %v554 = vunpack.c.h.b16 %v194
    %v555 = vunpack.c.l.b16 %v195
    %v556 = vunpack.c.h.b16 %v195
    %v557 = vunpack.c.l.b16 %v196
    %v558 = vunpack.c.h.b16 %v196
    %v559 = vunpack.c.l.b16 %v197
    %v560 = vunpack.c.h.b16 %v197
    %v561 = vunpack.c.l.b16 %v198
    %v562 = vunpack.c.h.b16 %v198
    %v563 = vunpack.c.l.b16 %v199
    %v564 = vunpack.c.h.b16 %v199
    %v565 = vunpack.c.l.b16 %v200
    %v566 = vunpack.c.h.b16 %v200
    %v567 = vunpack.c.l.b16 %v201
    %v568 = vunpack.c.h.b16 %v201
    %v569 = vunpack.c.l.b16 %v202
    %v570 = vunpack.c.h.b16 %v202
    %v571 = vunpack.c.l.b16 %v203
    %v572 = vunpack.c.h.b16 %v203
    %v573 = vunpack.c.l.b16 %v204
    %v574 = vunpack.c.h.b16 %v204
    %v575 = vunpack.c.l.b16 %v205
    %v576 = vunpack.c.h.b16 %v205
    %v577 = vunpack.c.l.b16 %v206
    %v578 = vunpack.c.h.b16 %v206
    %v579 = vunpack.c.l.b16 %v207
    %v580 = vunpack.c.h.b16 %v207
    %v581 = vunpack.c.l.b16 %v208
    %v582 = vunpack.c.h.b16 %v208
    %v583 = vunpack.c.l.b16 %v209
    %v584 = vunpack.c.h.b16 %v209
    %v585 = vunpack.c.l.b16 %v210
    %v586 = vunpack.c.h.b16 %v210
    %v587 = vunpack.c.l.b16 %v211
    %v588 = vunpack.c.h.b16 %v211
    %v589 = vunpack.c.l.b16 %v212
    %v590 = vunpack.c.h.b16 %v212
    %v591 = vunpack.c.l.b16 %v213
    %v592 = vunpack.c.h.b16 %v213
    %v593 = vunpack.c.l.b16 %v214
    %v594 = vunpack.c.h.b16 %v214
    %v595 = vunpack.c.l.b16 %v215
    %v596 = vunpack.c.h.b16 %v215
    %v597 = vunpack.c.l.b16 %v216
    %v598 = vunpack.c.h.b16 %v216
    %v599 = vunpack.c.l.b16 %v217
    %v600 = vunpack.c.h.b16 %v217
    %v601 = vunpack.c.l.b16 %v218
    %v602 = vunpack.c.h.b16 %v218
    %v603 = vpack.c.b16 %v351, %v347
    %v604 = vpack.c.b16 %v352, %v348
    %v605 = vpack.c.b16 %v353, %v349
    %v606 = vpack.c.b16 %v354, %v350
    %v607 = vpack.c.b16 %v359, %v355
    %v608 = vpack.c.b16 %v360, %v356
    %v609 = vpack.c.b16 %v361, %v357
    %v610 = vpack.c.b16 %v362, %v358
    %v611 = vpack.c.b16 %v367, %v363
    %v612 = vpack.c.b16 %v368, %v364
    %v613 = vpack.c.b16 %v369, %v365
    %v614 = vpack.c.b16 %v370, %v366
    %v615 = vpack.c.b16 %v375, %v371
    %v616 = vpack.c.b16 %v376, %v372
    %v617 = vpack.c.b16 %v377, %v373
    %v618 = vpack.c.b16 %v378, %v374
    %v619 = vpack.c.b16 %v383, %v379
    %v620 = vpack.c.b16 %v384, %v380
    %v621 = vpack.c.b16 %v385, %v381
    %v622 = vpack.c.b16 %v386, %v382
    %v623 = vpack.c.b16 %v391, %v387
    %v624 = vpack.c.b16 %v392, %v388
    %v625 = vpack.c.b16 %v393, %v389
    %v626 = vpack.c.b16 %v394, %v390
    %v627 = vpack.c.b16 %v399, %v395
    %v628 = vpack.c.b16 %v400, %v396
    %v629 = vpack.c.b16 %v401, %v397
    %v630 = vpack.c.b16 %v402, %v398
    %v631 = vpack.c.b16 %v407, %v403
    %v632 = vpack.c.b16 %v408, %v404
    %v633 = vpack.c.b16 %v409, %v405
    %v634 = vpack.c.b16 %v410, %v406
    %v635 = vpack.c.b16 %v415, %v411
    %v636 = vpack.c.b16 %v416, %v412
    %v637 = vpack.c.b16 %v417, %v413
    %v638 = vpack.c.b16 %v418, %v414
    %v639 = vpack.c.b16 %v423, %v419
    %v640 = vpack.c.b16 %v424, %v420
    %v641 = vpack.c.b16 %v425, %v421
    %v642 = vpack.c.b16 %v426, %v422
    %v643 = vpack.c.b16 %v431, %v427
    %v644 = vpack.c.b16 %v432, %v428
    %v645 = vpack.c.b16 %v433, %v429
    %v646 = vpack.c.b16 %v434, %v430
    %v647 = vpack.c.b16 %v439, %v435
    %v648 = vpack.c.b16 %v440, %v436
    %v649 = vpack.c.b16 %v441, %v437
    %v650 = vpack.c.b16 %v442, %v438
    %v651 = vpack.c.b16 %v447, %v443
    %v652 = vpack.c.b16 %v448, %v444
    %v653 = vpack.c.b16 %v449, %v445
    %v654 = vpack.c.b16 %v450, %v446
    %v655 = vpack.c.b16 %v455, %v451
    %v656 = vpack.c.b16 %v456, %v452
    %v657 = vpack.c.b16 %v457, %v453
    %v658 = vpack.c.b16 %v458, %v454
    %v659 = vpack.c.b16 %v463, %v459
    %v660 = vpack.c.b16 %v464, %v460
    %v661 = vpack.c.b16 %v465, %v461
    %v662 = vpack.c.b16 %v466, %v462
    %v663 = vpack.c.b16 %v471, %v467
    %v664 = vpack.c.b16 %v472, %v468
    %v665 = vpack.c.b16 %v473, %v469
    %v666 = vpack.c.b16 %v474, %v470
    %v667 = vpack.c.b16 %v479, %v475
    %v668 = vpack.c.b16 %v480, %v476
    %v669 = vpack.c.b16 %v481, %v477
    %v670 = vpack.c.b16 %v482, %v478
    %v671 = vpack.c.b16 %v487, %v483
    %v672 = vpack.c.b16 %v488, %v484
    %v673 = vpack.c.b16 %v489, %v485
    %v674 = vpack.c.b16 %v490, %v486
    %v675 = vpack.c.b16 %v495, %v491
    %v676 = vpack.c.b16 %v496, %v492
    %v677 = vpack.c.b16 %v497, %v493
    %v678 = vpack.c.b16 %v498, %v494
    %v679 = vpack.c.b16 %v503, %v499
    %v680 = vpack.c.b16 %v504, %v500
    %v681 = vpack.c.b16 %v505, %v501
    %v682 = vpack.c.b16 %v506, %v502
    %v683 = vpack.c.b16 %v511, %v507
    %v684 = vpack.c.b16 %v512, %v508
    %v685 = vpack.c.b16 %v513, %v509
    %v686 = vpack.c.b16 %v514, %v510
    %v687 = vpack.c.b16 %v519, %v515
    %v688 = vpack.c.b16 %v520, %v516
    %v689 = vpack.c.b16 %v521, %v517
    %v690 = vpack.c.b16 %v522, %v518
    %v691 = vpack.c.b16 %v527, %v523
    %v692 = vpack.c.b16 %v528, %v524
    %v693 = vpack.c.b16 %v529, %v525
    %v694 = vpack.c.b16 %v530, %v526
    %v695 = vpack.c.b16 %v535, %v531
    %v696 = vpack.c.b16 %v536, %v532
    %v697 = vpack.c.b16 %v537, %v533
    %v698 = vpack.c.b16 %v538, %v534
    %v699 = vpack.c.b16 %v543, %v539
    %v700 = vpack.c.b16 %v544, %v540
    %v701 = vpack.c.b16 %v545, %v541
    %v702 = vpack.c.b16 %v546, %v542
    %v703 = vpack.c.b16 %v551, %v547
    %v704 = vpack.c.b16 %v552, %v548
    %v705 = vpack.c.b16 %v553, %v549
    %v706 = vpack.c.b16 %v554, %v550
    %v707 = vpack.c.b16 %v559, %v555
    %v708 = vpack.c.b16 %v560, %v556
    %v709 = vpack.c.b16 %v561, %v557
    %v710 = vpack.c.b16 %v562, %v558
    %v711 = vpack.c.b16 %v567, %v563
    %v712 = vpack.c.b16 %v568, %v564
    %v713 = vpack.c.b16 %v569, %v565
    %v714 = vpack.c.b16 %v570, %v566
    %v715 = vpack.c.b16 %v575, %v571
    %v716 = vpack.c.b16 %v576, %v572
    %v717 = vpack.c.b16 %v577, %v573
    %v718 = vpack.c.b16 %v578, %v574
    %v719 = vpack.c.b16 %v583, %v579
    %v720 = vpack.c.b16 %v584, %v580
    %v721 = vpack.c.b16 %v585, %v581
    %v722 = vpack.c.b16 %v586, %v582
    %v723 = vpack.c.b16 %v591, %v587
    %v724 = vpack.c.b16 %v592, %v588
    %v725 = vpack.c.b16 %v593, %v589
    %v726 = vpack.c.b16 %v594, %v590
    %v727 = vpack.c.b16 %v599, %v595
    %v728 = vpack.c.b16 %v600, %v596
    %v729 = vpack.c.b16 %v601, %v597
    %v730 = vpack.c.b16 %v602, %v598
    %859 = vmatprep.subr.bf16.mxu0 %v604
    %860 = vmatpush1.bf16.msra.mxu0 %v603
    %861 = vmatprep.subr.bf16.mxu0 %v608
    %862 = vmatpush1.bf16.msra.mxu0 %v607
    %863 = vmatprep.subr.bf16.mxu0 %v612
    %864 = vmatpush1.bf16.msra.mxu0 %v611
    %865 = vmatprep.subr.bf16.mxu0 %v616
    %866 = vmatpush1.bf16.msra.mxu0 %v615
    %867 = vmatprep.subr.bf16.mxu0 %v620
    %868 = vmatpush1.bf16.msra.mxu0 %v619
    %869 = vmatprep.subr.bf16.mxu0 %v624
    %870 = vmatpush1.bf16.msra.mxu0 %v623
    %871 = vmatprep.subr.bf16.mxu0 %v628
    %872 = vmatpush1.bf16.msra.mxu0 %v627
    %873 = vmatprep.subr.bf16.mxu0 %v632
    %874 = vmatpush1.bf16.msra.mxu0 %v631
    %875 = vmatprep.subr.bf16.mxu0 %v636
    %876 = vmatpush1.bf16.msra.mxu0 %v635
    %877 = vmatprep.subr.bf16.mxu0 %v640
    %878 = vmatpush1.bf16.msra.mxu0 %v639
    %879 = vmatprep.subr.bf16.mxu0 %v644
    %880 = vmatpush1.bf16.msra.mxu0 %v643
    %881 = vmatprep.subr.bf16.mxu0 %v648
    %882 = vmatpush1.bf16.msra.mxu0 %v647
    %883 = vmatprep.subr.bf16.mxu0 %v652
    %884 = vmatpush1.bf16.msra.mxu0 %v651
    %885 = vmatprep.subr.bf16.mxu0 %v656
    %886 = vmatpush1.bf16.msra.mxu0 %v655
    %887 = vmatprep.subr.bf16.mxu0 %v660
    %888 = vmatpush1.bf16.msra.mxu0 %v659
    %889 = vmatprep.subr.bf16.mxu0 %v664
    %890 = vmatpush1.bf16.msra.mxu0 %v663
    %891 = vmatprep.mubr.bf16.mxu0 %v76
    %892 = vmatmul.mubr.bf16.gmra.mrb[0].mxu0 %v75
    %v893 = vpop.f32.mrb[0].mxu0
    %v894 = vadd.f32 0.0, %v893
    %v895 = vpop.f32.mrb[0].mxu0
    %v896 = vadd.f32 0.0, %v895
    %v897 = vpop.f32.mrb[0].mxu0
    %v898 = vadd.f32 0.0, %v897
    %v899 = vpop.f32.mrb[0].mxu0
    %v900 = vadd.f32 0.0, %v899
    %901 = vmatprep.mubr.bf16.mxu0 %v80
    %902 = vmatmul.mubr.bf16.gmra.mrb[0].mxu0 %v79
    %v903 = vpop.f32.mrb[0].mxu0
    %v904 = vadd.f32 0.0, %v903
    %v905 = vpop.f32.mrb[0].mxu0
    %v906 = vadd.f32 0.0, %v905
    %v907 = vpop.f32.mrb[0].mxu0
    %v908 = vadd.f32 0.0, %v907
    %v909 = vpop.f32.mrb[0].mxu0
    %v910 = vadd.f32 0.0, %v909
    %911 = vmatprep.mubr.bf16.mxu0 %v84
    %912 = vmatmul.mubr.bf16.gmra.mrb[0].mxu0 %v83
    %v913 = vpop.f32.mrb[0].mxu0
    %v914 = vadd.f32 0.0, %v913
    %v915 = vpop.f32.mrb[0].mxu0
    %v916 = vadd.f32 0.0, %v915
    %v917 = vpop.f32.mrb[0].mxu0
    %v918 = vadd.f32 0.0, %v917
    %v919 = vpop.f32.mrb[0].mxu0
    %v920 = vadd.f32 0.0, %v919
    %921 = vmatprep.mubr.bf16.mxu0 %v88
    %922 = vmatmul.mubr.bf16.gmra.mrb[0].mxu0 %v87
    %v923 = vpop.f32.mrb[0].mxu0
    %v924 = vadd.f32 0.0, %v923
    %v925 = vpop.f32.mrb[0].mxu0
    %v926 = vadd.f32 0.0, %v925
    %v927 = vpop.f32.mrb[0].mxu0
    %v928 = vadd.f32 0.0, %v927
    %v929 = vpop.f32.mrb[0].mxu0
    %v930 = vadd.f32 0.0, %v929
    %931 = vdwg.mxu0
    %932 = vmatprep.subr.bf16.mxu0 %v668
    %933 = vmatpush1.bf16.msra.mxu0 %v667
    %934 = vmatprep.subr.bf16.mxu0 %v672
    %935 = vmatpush1.bf16.msra.mxu0 %v671
    %936 = vmatprep.subr.bf16.mxu0 %v676
    %937 = vmatpush1.bf16.msra.mxu0 %v675
    %938 = vmatprep.subr.bf16.mxu0 %v680
    %939 = vmatpush1.bf16.msra.mxu0 %v679
    %940 = vmatprep.subr.bf16.mxu0 %v684
    %941 = vmatpush1.bf16.msra.mxu0 %v683
    %942 = vmatprep.subr.bf16.mxu0 %v688
    %943 = vmatpush1.bf16.msra.mxu0 %v687
    %944 = vmatprep.subr.bf16.mxu0 %v692
    %945 = vmatpush1.bf16.msra.mxu0 %v691
    %946 = vmatprep.subr.bf16.mxu0 %v696
    %947 = vmatpush1.bf16.msra.mxu0 %v695
    %948 = vmatprep.subr.bf16.mxu0 %v700
    %949 = vmatpush1.bf16.msra.mxu0 %v699
    %950 = vmatprep.subr.bf16.mxu0 %v704
    %951 = vmatpush1.bf16.msra.mxu0 %v703
    %952 = vmatprep.subr.bf16.mxu0 %v708
    %953 = vmatpush1.bf16.msra.mxu0 %v707
    %954 = vmatprep.subr.bf16.mxu0 %v712
    %955 = vmatpush1.bf16.msra.mxu0 %v711
    %956 = vmatprep.subr.bf16.mxu0 %v716
    %957 = vmatpush1.bf16.msra.mxu0 %v715
    %958 = vmatprep.subr.bf16.mxu0 %v720
    %959 = vmatpush1.bf16.msra.mxu0 %v719
    %960 = vmatprep.subr.bf16.mxu0 %v724
    %961 = vmatpush1.bf16.msra.mxu0 %v723
    %962 = vmatprep.subr.bf16.mxu0 %v728
    %963 = vmatpush1.bf16.msra.mxu0 %v727
    %964 = vmatprep.mubr.bf16.mxu0 %v78
    %965 = vmatmul.mubr.bf16.gmra.mrb[0].mxu0 %v77
    %v966 = vpop.f32.mrb[0].mxu0
    %v967 = vadd.f32 %v894, %v966
    %v968 = vpop.f32.mrb[0].mxu0
    %v969 = vadd.f32 %v896, %v968
    %v970 = vpop.f32.mrb[0].mxu0
    %v971 = vadd.f32 %v898, %v970
    %v972 = vpop.f32.mrb[0].mxu0
    %v973 = vadd.f32 %v900, %v972
    %974 = vmatprep.mubr.bf16.mxu0 %v82
    %975 = vmatmul.mubr.bf16.gmra.mrb[0].mxu0 %v81
    %v976 = vpop.f32.mrb[0].mxu0
    %v977 = vadd.f32 %v904, %v976
    %v978 = vpop.f32.mrb[0].mxu0
    %v979 = vadd.f32 %v906, %v978
    %v980 = vpop.f32.mrb[0].mxu0
    %v981 = vadd.f32 %v908, %v980
    %v982 = vpop.f32.mrb[0].mxu0
    %v983 = vadd.f32 %v910, %v982
    %984 = vmatprep.mubr.bf16.mxu0 %v86
    %985 = vmatmul.mubr.bf16.gmra.mrb[0].mxu0 %v85
    %v986 = vpop.f32.mrb[0].mxu0
    %v987 = vadd.f32 %v914, %v986
    %v988 = vpop.f32.mrb[0].mxu0
    %v989 = vadd.f32 %v916, %v988
    %v990 = vpop.f32.mrb[0].mxu0
    %v991 = vadd.f32 %v918, %v990
    %v992 = vpop.f32.mrb[0].mxu0
    %v993 = vadd.f32 %v920, %v992
    %994 = vmatprep.mubr.bf16.mxu0 %v90
    %995 = vmatmul.mubr.bf16.gmra.mrb[0].mxu0 %v89
    %v996 = vpop.f32.mrb[0].mxu0
    %v997 = vadd.f32 %v924, %v996
    %v998 = vpop.f32.mrb[0].mxu0
    %v999 = vadd.f32 %v926, %v998
    %v1000 = vpop.f32.mrb[0].mxu0
    %v1001 = vadd.f32 %v928, %v1000
    %v1002 = vpop.f32.mrb[0].mxu0
    %v1003 = vadd.f32 %v930, %v1002
    %1004 = vdwg.mxu0
    %1005 = vmatprep.subr.bf16.mxu0 %v606
    %1006 = vmatpush1.bf16.msra.mxu0 %v605
    %1007 = vmatprep.subr.bf16.mxu0 %v610
    %1008 = vmatpush1.bf16.msra.mxu0 %v609
    %1009 = vmatprep.subr.bf16.mxu0 %v614
    %1010 = vmatpush1.bf16.msra.mxu0 %v613
    %1011 = vmatprep.subr.bf16.mxu0 %v618
    %1012 = vmatpush1.bf16.msra.mxu0 %v617
    %1013 = vmatprep.subr.bf16.mxu0 %v622
    %1014 = vmatpush1.bf16.msra.mxu0 %v621
    %1015 = vmatprep.subr.bf16.mxu0 %v626
    %1016 = vmatpush1.bf16.msra.mxu0 %v625
    %1017 = vmatprep.subr.bf16.mxu0 %v630
    %1018 = vmatpush1.bf16.msra.mxu0 %v629
    %1019 = vmatprep.subr.bf16.mxu0 %v634
    %1020 = vmatpush1.bf16.msra.mxu0 %v633
    %1021 = vmatprep.subr.bf16.mxu0 %v638
    %1022 = vmatpush1.bf16.msra.mxu0 %v637
    %1023 = vmatprep.subr.bf16.mxu0 %v642
    %1024 = vmatpush1.bf16.msra.mxu0 %v641
    %1025 = vmatprep.subr.bf16.mxu0 %v646
    %1026 = vmatpush1.bf16.msra.mxu0 %v645
    %1027 = vmatprep.subr.bf16.mxu0 %v650
    %1028 = vmatpush1.bf16.msra.mxu0 %v649
    %1029 = vmatprep.subr.bf16.mxu0 %v654
    %1030 = vmatpush1.bf16.msra.mxu0 %v653
    %1031 = vmatprep.subr.bf16.mxu0 %v658
    %1032 = vmatpush1.bf16.msra.mxu0 %v657
    %1033 = vmatprep.subr.bf16.mxu0 %v662
    %1034 = vmatpush1.bf16.msra.mxu0 %v661
    %1035 = vmatprep.subr.bf16.mxu0 %v666
    %1036 = vmatpush1.bf16.msra.mxu0 %v665
    %1037 = vmatprep.mubr.bf16.mxu0 %v76
    %1038 = vmatmul.mubr.bf16.gmra.mrb[0].mxu0 %v75
    %v1039 = vpop.f32.mrb[0].mxu0
    %v1040 = vadd.f32 0.0, %v1039
    %v1041 = vpop.f32.mrb[0].mxu0
    %v1042 = vadd.f32 0.0, %v1041
    %v1043 = vpop.f32.mrb[0].mxu0
    %v1044 = vadd.f32 0.0, %v1043
    %v1045 = vpop.f32.mrb[0].mxu0
    %v1046 = vadd.f32 0.0, %v1045
    %1047 = vmatprep.mubr.bf16.mxu0 %v80
    %1048 = vmatmul.mubr.bf16.gmra.mrb[0].mxu0 %v79
    %v1049 = vpop.f32.mrb[0].mxu0
    %v1050 = vadd.f32 0.0, %v1049
    %v1051 = vpop.f32.mrb[0].mxu0
    %v1052 = vadd.f32 0.0, %v1051
    %v1053 = vpop.f32.mrb[0].mxu0
    %v1054 = vadd.f32 0.0, %v1053
    %v1055 = vpop.f32.mrb[0].mxu0
    %v1056 = vadd.f32 0.0, %v1055
    %1057 = vmatprep.mubr.bf16.mxu0 %v84
    %1058 = vmatmul.mubr.bf16.gmra.mrb[0].mxu0 %v83
    %v1059 = vpop.f32.mrb[0].mxu0
    %v1060 = vadd.f32 0.0, %v1059
    %v1061 = vpop.f32.mrb[0].mxu0
    %v1062 = vadd.f32 0.0, %v1061
    %v1063 = vpop.f32.mrb[0].mxu0
    %v1064 = vadd.f32 0.0, %v1063
    %v1065 = vpop.f32.mrb[0].mxu0
    %v1066 = vadd.f32 0.0, %v1065
    %1067 = vmatprep.mubr.bf16.mxu0 %v88
    %1068 = vmatmul.mubr.bf16.gmra.mrb[0].mxu0 %v87
    %v1069 = vpop.f32.mrb[0].mxu0
    %v1070 = vadd.f32 0.0, %v1069
    %v1071 = vpop.f32.mrb[0].mxu0
    %v1072 = vadd.f32 0.0, %v1071
    %v1073 = vpop.f32.mrb[0].mxu0
    %v1074 = vadd.f32 0.0, %v1073
    %v1075 = vpop.f32.mrb[0].mxu0
    %v1076 = vadd.f32 0.0, %v1075
    %1077 = vdwg.mxu0
    %1078 = vmatprep.subr.bf16.mxu0 %v670
    %1079 = vmatpush1.bf16.msra.mxu0 %v669
    %1080 = vmatprep.subr.bf16.mxu0 %v674
    %1081 = vmatpush1.bf16.msra.mxu0 %v673
    %1082 = vmatprep.subr.bf16.mxu0 %v678
    %1083 = vmatpush1.bf16.msra.mxu0 %v677
    %1084 = vmatprep.subr.bf16.mxu0 %v682
    %1085 = vmatpush1.bf16.msra.mxu0 %v681
    %1086 = vmatprep.subr.bf16.mxu0 %v686
    %1087 = vmatpush1.bf16.msra.mxu0 %v685
    %1088 = vmatprep.subr.bf16.mxu0 %v690
    %1089 = vmatpush1.bf16.msra.mxu0 %v689
    %1090 = vmatprep.subr.bf16.mxu0 %v694
    %1091 = vmatpush1.bf16.msra.mxu0 %v693
    %1092 = vmatprep.subr.bf16.mxu0 %v698
    %1093 = vmatpush1.bf16.msra.mxu0 %v697
    %1094 = vmatprep.subr.bf16.mxu0 %v702
    %1095 = vmatpush1.bf16.msra.mxu0 %v701
    %1096 = vmatprep.subr.bf16.mxu0 %v706
    %1097 = vmatpush1.bf16.msra.mxu0 %v705
    %1098 = vmatprep.subr.bf16.mxu0 %v710
    %1099 = vmatpush1.bf16.msra.mxu0 %v709
    %1100 = vmatprep.subr.bf16.mxu0 %v714
    %1101 = vmatpush1.bf16.msra.mxu0 %v713
    %1102 = vmatprep.subr.bf16.mxu0 %v718
    %1103 = vmatpush1.bf16.msra.mxu0 %v717
    %1104 = vmatprep.subr.bf16.mxu0 %v722
    %1105 = vmatpush1.bf16.msra.mxu0 %v721
    %1106 = vmatprep.subr.bf16.mxu0 %v726
    %1107 = vmatpush1.bf16.msra.mxu0 %v725
    %1108 = vmatprep.subr.bf16.mxu0 %v730
    %1109 = vmatpush1.bf16.msra.mxu0 %v729
    %1110 = vmatprep.mubr.bf16.mxu0 %v78
    %1111 = vmatmul.mubr.bf16.gmra.mrb[0].mxu0 %v77
    %v1112 = vpop.f32.mrb[0].mxu0
    %v1113 = vadd.f32 %v1040, %v1112
    %v1114 = vpop.f32.mrb[0].mxu0
    %v1115 = vadd.f32 %v1042, %v1114
    %v1116 = vpop.f32.mrb[0].mxu0
    %v1117 = vadd.f32 %v1044, %v1116
    %v1118 = vpop.f32.mrb[0].mxu0
    %v1119 = vadd.f32 %v1046, %v1118
    %1120 = vmatprep.mubr.bf16.mxu0 %v82
    %1121 = vmatmul.mubr.bf16.gmra.mrb[0].mxu0 %v81
    %v1122 = vpop.f32.mrb[0].mxu0
    %v1123 = vadd.f32 %v1050, %v1122
    %v1124 = vpop.f32.mrb[0].mxu0
    %v1125 = vadd.f32 %v1052, %v1124
    %v1126 = vpop.f32.mrb[0].mxu0
    %v1127 = vadd.f32 %v1054, %v1126
    %v1128 = vpop.f32.mrb[0].mxu0
    %v1129 = vadd.f32 %v1056, %v1128
    %1130 = vmatprep.mubr.bf16.mxu0 %v86
    %1131 = vmatmul.mubr.bf16.gmra.mrb[0].mxu0 %v85
    %v1132 = vpop.f32.mrb[0].mxu0
    %v1133 = vadd.f32 %v1060, %v1132
    %v1134 = vpop.f32.mrb[0].mxu0
    %v1135 = vadd.f32 %v1062, %v1134
    %v1136 = vpop.f32.mrb[0].mxu0
    %v1137 = vadd.f32 %v1064, %v1136
    %v1138 = vpop.f32.mrb[0].mxu0
    %v1139 = vadd.f32 %v1066, %v1138
    %1140 = vmatprep.mubr.bf16.mxu0 %v90
    %1141 = vmatmul.mubr.bf16.gmra.mrb[0].mxu0 %v89
    %v1142 = vpop.f32.mrb[0].mxu0
    %v1143 = vadd.f32 %v1070, %v1142
    %v1144 = vpop.f32.mrb[0].mxu0
    %v1145 = vadd.f32 %v1072, %v1144
    %v1146 = vpop.f32.mrb[0].mxu0
    %v1147 = vadd.f32 %v1074, %v1146
    %v1148 = vpop.f32.mrb[0].mxu0
    %v1149 = vadd.f32 %v1076, %v1148
    %1150 = vdwg.mxu0
    %v1151 = vpack.c.bf16 %v971, %v967
    %v1152 = vpack.c.bf16 %v973, %v969
    %v1153 = vpack.c.bf16 %v1117, %v1113
    %v1154 = vpack.c.bf16 %v1119, %v1115
    %v1155 = vpack.c.bf16 %v981, %v977
    %v1156 = vpack.c.bf16 %v983, %v979
    %v1157 = vpack.c.bf16 %v1127, %v1123
    %v1158 = vpack.c.bf16 %v1129, %v1125
    %v1159 = vpack.c.bf16 %v991, %v987
    %v1160 = vpack.c.bf16 %v993, %v989
    %v1161 = vpack.c.bf16 %v1137, %v1133
    %v1162 = vpack.c.bf16 %v1139, %v1135
    %v1163 = vpack.c.bf16 %v1001, %v997
    %v1164 = vpack.c.bf16 %v1003, %v999
    %v1165 = vpack.c.bf16 %v1147, %v1143
    %v1166 = vpack.c.bf16 %v1149, %v1145
    %v1183 = vunpack.c.l.b16 %v1151
    %v1184 = vunpack.c.l.b16 %v1152
    %v1185 = vunpack.c.l.b16 %v1153
    %v1186 = vunpack.c.l.b16 %v1154
    %v1187 = vunpack.c.h.b16 %v1151
    %v1188 = vunpack.c.h.b16 %v1152
    %v1189 = vunpack.c.h.b16 %v1153
    %v1190 = vunpack.c.h.b16 %v1154
    %v1191 = vunpack.c.l.b16 %v1155
    %v1192 = vunpack.c.l.b16 %v1156
    %v1193 = vunpack.c.l.b16 %v1157
    %v1194 = vunpack.c.l.b16 %v1158
    %v1195 = vunpack.c.h.b16 %v1155
    %v1196 = vunpack.c.h.b16 %v1156
    %v1197 = vunpack.c.h.b16 %v1157
    %v1198 = vunpack.c.h.b16 %v1158
    %v1199 = vunpack.c.l.b16 %v1159
    %v1200 = vunpack.c.l.b16 %v1160
    %v1201 = vunpack.c.l.b16 %v1161
    %v1202 = vunpack.c.l.b16 %v1162
    %v1203 = vunpack.c.h.b16 %v1159
    %v1204 = vunpack.c.h.b16 %v1160
    %v1205 = vunpack.c.h.b16 %v1161
    %v1206 = vunpack.c.h.b16 %v1162
    %v1207 = vunpack.c.l.b16 %v1163
    %v1208 = vunpack.c.l.b16 %v1164
    %v1209 = vunpack.c.l.b16 %v1165
    %v1210 = vunpack.c.l.b16 %v1166
    %v1211 = vunpack.c.h.b16 %v1163
    %v1212 = vunpack.c.h.b16 %v1164
    %v1213 = vunpack.c.h.b16 %v1165
    %v1214 = vunpack.c.h.b16 %v1166
    %v1215 = vpack.c.b16 %v1184, %v1183
    %v1216 = vpack.c.b16 %v1186, %v1185
    %v1217 = vpack.c.b16 %v1188, %v1187
    %v1218 = vpack.c.b16 %v1190, %v1189
    %v1219 = vpack.c.b16 %v1192, %v1191
    %v1220 = vpack.c.b16 %v1194, %v1193
    %v1221 = vpack.c.b16 %v1196, %v1195
    %v1222 = vpack.c.b16 %v1198, %v1197
    %v1223 = vpack.c.b16 %v1200, %v1199
    %v1224 = vpack.c.b16 %v1202, %v1201
    %v1225 = vpack.c.b16 %v1204, %v1203
    %v1226 = vpack.c.b16 %v1206, %v1205
    %v1227 = vpack.c.b16 %v1208, %v1207
    %v1228 = vpack.c.b16 %v1210, %v1209
    %v1229 = vpack.c.b16 %v1212, %v1211
    %v1230 = vpack.c.b16 %v1214, %v1213
    %1247 = vst [vmem:[#allocation7] sm:$0xff] %v1215
    %1248 = vst [vmem:[#allocation7 + $0x8] sm:$0xff] %v1216
    %1249 = vst [vmem:[#allocation7 + $0x10] sm:$0xff] %v1217
    %1250 = vst [vmem:[#allocation7 + $0x18] sm:$0xff] %v1218
    %1251 = vst [vmem:[#allocation7 + $0x20] sm:$0xff] %v1219
    %1252 = vst [vmem:[#allocation7 + $0x28] sm:$0xff] %v1220
    %1253 = vst [vmem:[#allocation7 + $0x30] sm:$0xff] %v1221
    %1254 = vst [vmem:[#allocation7 + $0x38] sm:$0xff] %v1222
    %1255 = vst [vmem:[#allocation7 + $0x40] sm:$0xff] %v1223
    %1256 = vst [vmem:[#allocation7 + $0x48] sm:$0xff] %v1224
    %1257 = vst [vmem:[#allocation7 + $0x50] sm:$0xff] %v1225
    %1258 = vst [vmem:[#allocation7 + $0x58] sm:$0xff] %v1226
    %1259 = vst [vmem:[#allocation7 + $0x60] sm:$0xff] %v1227
    %1260 = vst [vmem:[#allocation7 + $0x68] sm:$0xff] %v1228
    %1261 = vst [vmem:[#allocation7 + $0x70] sm:$0xff] %v1229
    %1262 = vst [vmem:[#allocation7 + $0x78] sm:$0xff] %v1230
    %v1263 = vadd.f32 %v967, %v971
    %v1264 = vadd.f32 %v1263, %v977
    %v1265 = vadd.f32 %v1264, %v981
    %v1266 = vadd.f32 %v1265, %v987
    %v1267 = vadd.f32 %v1266, %v991
    %v1268 = vadd.f32 %v1267, %v997
    %v1269 = vadd.f32 %v1268, %v1001
    %v1270 = vrot.slane %v1269, 4
    %v1271 = vadd.f32 %v1269, %v1270
    %v1272 = vrot.slane %v1271, 2
    %v1273 = vadd.f32 %v1271, %v1272
    %v1274 = vrot.slane %v1273, 1
    %v1275 = vadd.f32 %v1273, %v1274
    %v1276 = vadd.f32 %v969, %v973
    %v1277 = vadd.f32 %v1276, %v979
    %v1278 = vadd.f32 %v1277, %v983
    %v1279 = vadd.f32 %v1278, %v989
    %v1280 = vadd.f32 %v1279, %v993
    %v1281 = vadd.f32 %v1280, %v999
    %v1282 = vadd.f32 %v1281, %v1003
    %v1283 = vrot.slane %v1282, 4
    %v1284 = vadd.f32 %v1282, %v1283
    %v1285 = vrot.slane %v1284, 2
    %v1286 = vadd.f32 %v1284, %v1285
    %v1287 = vrot.slane %v1286, 1
    %v1288 = vadd.f32 %v1286, %v1287
    %v1289 = vadd.f32 %v1113, %v1117
    %v1290 = vadd.f32 %v1289, %v1123
    %v1291 = vadd.f32 %v1290, %v1127
    %v1292 = vadd.f32 %v1291, %v1133
    %v1293 = vadd.f32 %v1292, %v1137
    %v1294 = vadd.f32 %v1293, %v1143
    %v1295 = vadd.f32 %v1294, %v1147
    %v1296 = vrot.slane %v1295, 4
    %v1297 = vadd.f32 %v1295, %v1296
    %v1298 = vrot.slane %v1297, 2
    %v1299 = vadd.f32 %v1297, %v1298
    %v1300 = vrot.slane %v1299, 1
    %v1301 = vadd.f32 %v1299, %v1300
    %v1302 = vadd.f32 %v1115, %v1119
    %v1303 = vadd.f32 %v1302, %v1125
    %v1304 = vadd.f32 %v1303, %v1129
    %v1305 = vadd.f32 %v1304, %v1135
    %v1306 = vadd.f32 %v1305, %v1139
    %v1307 = vadd.f32 %v1306, %v1145
    %v1308 = vadd.f32 %v1307, %v1149
    %v1309 = vrot.slane %v1308, 4
    %v1310 = vadd.f32 %v1308, %v1309
    %v1311 = vrot.slane %v1310, 2
    %v1312 = vadd.f32 %v1310, %v1311
    %v1313 = vrot.slane %v1312, 1
    %v1314 = vadd.f32 %v1312, %v1313
    %v1315 = vmul.f32 %v967, %v967
    %v1316 = vmul.f32 %v969, %v969
    %v1317 = vmul.f32 %v1113, %v1113
    %v1318 = vmul.f32 %v1115, %v1115
    %v1319 = vmul.f32 %v971, %v971
    %v1320 = vmul.f32 %v973, %v973
    %v1321 = vmul.f32 %v1117, %v1117
    %v1322 = vmul.f32 %v1119, %v1119
    %v1323 = vmul.f32 %v977, %v977
    %v1324 = vmul.f32 %v979, %v979
    %v1325 = vmul.f32 %v1123, %v1123
    %v1326 = vmul.f32 %v1125, %v1125
    %v1327 = vmul.f32 %v981, %v981
    %v1328 = vmul.f32 %v983, %v983
    %v1329 = vmul.f32 %v1127, %v1127
    %v1330 = vmul.f32 %v1129, %v1129
    %v1331 = vmul.f32 %v987, %v987
    %v1332 = vmul.f32 %v989, %v989
    %v1333 = vmul.f32 %v1133, %v1133
    %v1334 = vmul.f32 %v1135, %v1135
    %v1335 = vmul.f32 %v991, %v991
    %v1336 = vmul.f32 %v993, %v993
    %v1337 = vmul.f32 %v1137, %v1137
    %v1338 = vmul.f32 %v1139, %v1139
    %v1339 = vmul.f32 %v997, %v997
    %v1340 = vmul.f32 %v999, %v999
    %v1341 = vmul.f32 %v1143, %v1143
    %v1342 = vmul.f32 %v1145, %v1145
    %v1343 = vmul.f32 %v1001, %v1001
    %v1344 = vmul.f32 %v1003, %v1003
    %v1345 = vmul.f32 %v1147, %v1147
    %v1346 = vmul.f32 %v1149, %v1149
    %v1347 = vadd.f32 %v1315, %v1319
    %v1348 = vadd.f32 %v1347, %v1323
    %v1349 = vadd.f32 %v1348, %v1327
    %v1350 = vadd.f32 %v1349, %v1331
    %v1351 = vadd.f32 %v1350, %v1335
    %v1352 = vadd.f32 %v1351, %v1339
    %v1353 = vadd.f32 %v1352, %v1343
    %v1354 = vrot.slane %v1353, 4
    %v1355 = vadd.f32 %v1353, %v1354
    %v1356 = vrot.slane %v1355, 2
    %v1357 = vadd.f32 %v1355, %v1356
    %v1358 = vrot.slane %v1357, 1
    %v1359 = vadd.f32 %v1357, %v1358
    %v1360 = vadd.f32 %v1316, %v1320
    %v1361 = vadd.f32 %v1360, %v1324
    %v1362 = vadd.f32 %v1361, %v1328
    %v1363 = vadd.f32 %v1362, %v1332
    %v1364 = vadd.f32 %v1363, %v1336
    %v1365 = vadd.f32 %v1364, %v1340
    %v1366 = vadd.f32 %v1365, %v1344
    %v1367 = vrot.slane %v1366, 4
    %v1368 = vadd.f32 %v1366, %v1367
    %v1369 = vrot.slane %v1368, 2
    %v1370 = vadd.f32 %v1368, %v1369
    %v1371 = vrot.slane %v1370, 1
    %v1372 = vadd.f32 %v1370, %v1371
    %v1373 = vadd.f32 %v1317, %v1321
    %v1374 = vadd.f32 %v1373, %v1325
    %v1375 = vadd.f32 %v1374, %v1329
    %v1376 = vadd.f32 %v1375, %v1333
    %v1377 = vadd.f32 %v1376, %v1337
    %v1378 = vadd.f32 %v1377, %v1341
    %v1379 = vadd.f32 %v1378, %v1345
    %v1380 = vrot.slane %v1379, 4
    %v1381 = vadd.f32 %v1379, %v1380
    %v1382 = vrot.slane %v1381, 2
    %v1383 = vadd.f32 %v1381, %v1382
    %v1384 = vrot.slane %v1383, 1
    %v1385 = vadd.f32 %v1383, %v1384
    %v1386 = vadd.f32 %v1318, %v1322
    %v1387 = vadd.f32 %v1386, %v1326
    %v1388 = vadd.f32 %v1387, %v1330
    %v1389 = vadd.f32 %v1388, %v1334
    %v1390 = vadd.f32 %v1389, %v1338
    %v1391 = vadd.f32 %v1390, %v1342
    %v1392 = vadd.f32 %v1391, %v1346
    %v1393 = vrot.slane %v1392, 4
    %v1394 = vadd.f32 %v1392, %v1393
    %v1395 = vrot.slane %v1394, 2
    %v1396 = vadd.f32 %v1394, %v1395
    %v1397 = vrot.slane %v1396, 1
    %v1398 = vadd.f32 %v1396, %v1397
    %vm1399 = vcmask 1040384
    %v1400 = vsel %vm1399, %v1275, %v1359
    %v1401 = vsel %vm1399, %v1288, %v1372
    %v1402 = vsel %vm1399, %v1301, %v1385
    %v1403 = vsel %vm1399, %v1314, %v1398
    %vm1404 = vcmask 1041408
    %v1405 = vsel %vm1404, %v1400, 0.0
    %v1406 = vsel %vm1404, %v1401, 0.0
    %v1407 = vsel %vm1404, %v1402, 0.0
    %v1408 = vsel %vm1404, %v1403, 0.0
    %1409 = vst [vmem:[#allocation8] sm:$0xff] %v1405
    %1410 = vst [vmem:[#allocation8 + $0x8] sm:$0xff] %v1406
    %1411 = vst [vmem:[#allocation8 + $0x10] sm:$0xff] %v1407
    %1412 = vst [vmem:[#allocation8 + $0x18] sm:$0xff] %v1408
    // Predicated region
    $region18: #{tpu_custom_call.1} parent=1 // pred_check
      _
    $region19: #{tpu_custom_call.1} parent=1 // pred_check_branch
      %1414 = sbr.rel (0) target = $region21
    $region20: #{tpu_custom_call.1} parent=1 // pred_region
      %s1416 = ssub.s32 2048, 2048
      %1417 = vsyncadd [#allocation4], %s1416
      %s1418 = sshll.u32 [#allocation7], 4
      %s1419 = int_to_ptr.vmem [resolvable:$true] %s1418
      %1424 = dma.vmem_to_hbm [thread:$0]  %s1419, 2048, %s2, [#allocation4], 256, 256, 16
    $region21: #{tpu_custom_call.1} parent=1 // pred_fallthru
      _
    // Predicated region
    $region22: #{tpu_custom_call.1} parent=1 // pred_check
      _
    $region23: #{tpu_custom_call.1} parent=1 // pred_check_branch
      %1426 = sbr.rel (0) target = $region25
    $region24: #{tpu_custom_call.1} parent=1 // pred_region
      %s1428 = ssub.s32 512, 512
      %1429 = vsyncadd [#allocation9], %s1428
      %s1431 = sshll.u32 [#allocation8], 4
      %s1432 = int_to_ptr.vmem [resolvable:$true] %s1431
      %1434 = dma.vmem_to_hbm [thread:$0]  %s1432, 512, %s3, [#allocation9]
    $region25: #{tpu_custom_call.1} parent=1 // pred_fallthru
      _
    // Predicated region
    $region26: #{tpu_custom_call.1} parent=1 // pred_check
      _
    $region27: #{tpu_custom_call.1} parent=1 // pred_check_branch
      %1436 = sbr.rel (0) target = $region29
    $region28: #{tpu_custom_call.1} parent=1 // pred_region
      %1437 = dma.done [#allocation4], 2048
    $region29: #{tpu_custom_call.1} parent=1 // pred_fallthru
      _
    // Predicated region
    $region30: #{tpu_custom_call.1} parent=1 // pred_check
      _
    $region31: #{tpu_custom_call.1} parent=1 // pred_check_branch
      %1439 = sbr.rel (0) target = $region33
    $region32: #{tpu_custom_call.1} parent=1 // pred_region
      %1440 = dma.done [#allocation9], 512
    $region33: #{tpu_custom_call.1} parent=1 // pred_fallthru
      _
    %1441 = vsyncpa [#allocation3], 1
    %1442 = vsyncpa [#allocation6], 1
    %1443 = vsyncpa [#allocation4], 1
    %1444 = vsyncpa [#allocation9], 1

// kernel: tpu_custom_call.1
$region0: #{tpu_custom_call.1}
  #allocation0 [shape = 'u32[]', space=smem, size = 0x4, offset = 0x4, fixed_abs, tag = 'smem constant byte address 0x4 - core index']
  #allocation1 [shape = 'u32[144,128]{1,0:T(1,128)}', space=vmem, size = 0x12000, scoped, tag = 'internal scratch']
  %s0 = inlined_call_operand.hbm [shape: f32[64,512], index: 0, kind: input, shape index: {}]
  %s1 = inlined_call_operand.hbm [shape: bf16[512,512], index: 1, kind: input, shape index: {}]
  %s2 = inlined_call_operand.hbm [shape: bf16[64,512], index: 2, kind: output, shape index: {0}]
  %s3 = inlined_call_operand.hbm [shape: f32[8,512], index: 3, kind: output, shape index: {1}]
  %4 = xla_tuple %s2, %s3
  %s5 = sld [smem:[#allocation0]]
  $region34: #{tpu_custom_call.1} parent=0
    _
  %s7 = ssub.s32 1, %s5
  %s8 = scalar_select 0, %s7, %s5
  $region1: #{tpu_custom_call.1} parent=0
    #allocation2 [shape = 'u8[131072]{0}', space=vmem, size = 0x20000, scoped, tag = 'input window, operand 0, single buffered']
    #allocation3 [shape = 's32[1]{0}', space=sflag, size = 0x4, scoped, tag = 'scoped memory for tpu_custom_call.1']
    #allocation4 [shape = 's32[1]{0}', space=sflag, size = 0x4, scoped, tag = 'scoped memory for tpu_custom_call.1']
    #allocation5 [shape = 'u8[524288]{0}', space=vmem, size = 0x80000, scoped, tag = 'input window, operand 1, single buffered']
    #allocation6 [shape = 's32[1]{0}', space=sflag, size = 0x4, scoped, tag = 'scoped memory for tpu_custom_call.1']
    #allocation7 [shape = 'u8[65536]{0}', space=vmem, size = 0x10000, scoped, tag = 'output window, operand 0, single buffered']
    #allocation8 [shape = 'u8[16384]{0}', space=vmem, size = 0x4000, scoped, tag = 'output window, operand 1, single buffered']
    #allocation9 [shape = 's32[1]{0}', space=sflag, size = 0x4, scoped, tag = 'scoped memory for tpu_custom_call.1']
    %9 = vsyncpa [#allocation3], 0
    %10 = vsyncpa [#allocation6], 0
    %11 = vsyncpa [#allocation4], 0
    %12 = vsyncpa [#allocation9], 0
    // Predicated region
    $region2: #{tpu_custom_call.1} parent=1 // pred_check
      _
    $region3: #{tpu_custom_call.1} parent=1 // pred_check_branch
      %14 = sbr.rel (0) target = $region5
    $region4: #{tpu_custom_call.1} parent=1 // pred_region
      %s16 = ssub.s32 4096, 4096
      %17 = vsyncadd [#allocation3], %s16
      %s18 = sshll.u32 [#allocation2], 4
      %s19 = int_to_ptr.vmem [resolvable:$true] %s18
      %24 = dma.hbm_to_vmem [thread:$0]  %s0, 4096, %s19, [#allocation3], 512, 512, 32
    $region5: #{tpu_custom_call.1} parent=1 // pred_fallthru
      _
    // Predicated region
    $region6: #{tpu_custom_call.1} parent=1 // pred_check
      _
    $region7: #{tpu_custom_call.1} parent=1 // pred_check_branch
      %26 = sbr.rel (0) target = $region9
    $region8: #{tpu_custom_call.1} parent=1 // pred_region
      %s28 = ssub.s32 16384, 16384
      %29 = vsyncadd [#allocation6], %s28
      %s30 = sshll.u32 [#allocation5], 4
      %s31 = int_to_ptr.vmem [resolvable:$true] %s30
      %36 = dma.hbm_to_vmem [thread:$0]  %s1, 16384, %s31, [#allocation6], 256, 256, 16
    $region9: #{tpu_custom_call.1} parent=1 // pred_fallthru
      _
    // Predicated region
    $region10: #{tpu_custom_call.1} parent=1 // pred_check
      _
    $region11: #{tpu_custom_call.1} parent=1 // pred_check_branch
      %38 = sbr.rel (0) target = $region13
    $region12: #{tpu_custom_call.1} parent=1 // pred_region
      %39 = dma.done [#allocation3], 4096
    $region13: #{tpu_custom_call.1} parent=1 // pred_fallthru
      _
    // Predicated region
    $region14: #{tpu_custom_call.1} parent=1 // pred_check
      _
    $region15: #{tpu_custom_call.1} parent=1 // pred_check_branch
      %41 = sbr.rel (0) target = $region17
    $region16: #{tpu_custom_call.1} parent=1 // pred_region
      %42 = dma.done [#allocation6], 16384
    $region17: #{tpu_custom_call.1} parent=1 // pred_fallthru
      _
    %v43 = vld [vmem:[#allocation2] sm:$0xff]
    %v44 = vld [vmem:[#allocation2 + $0x8] sm:$0xff]
    %v45 = vld [vmem:[#allocation2 + $0x10] sm:$0xff]
    %v46 = vld [vmem:[#allocation2 + $0x18] sm:$0xff]
    %v47 = vld [vmem:[#allocation2 + $0x20] sm:$0xff]
    %v48 = vld [vmem:[#allocation2 + $0x28] sm:$0xff]
    %v49 = vld [vmem:[#allocation2 + $0x30] sm:$0xff]
    %v50 = vld [vmem:[#allocation2 + $0x38] sm:$0xff]
    %v51 = vld [vmem:[#allocation2 + $0x40] sm:$0xff]
    %v52 = vld [vmem:[#allocation2 + $0x48] sm:$0xff]
    %v53 = vld [vmem:[#allocation2 + $0x50] sm:$0xff]
    %v54 = vld [vmem:[#allocation2 + $0x58] sm:$0xff]
    %v55 = vld [vmem:[#allocation2 + $0x60] sm:$0xff]
    %v56 = vld [vmem:[#allocation2 + $0x68] sm:$0xff]
    %v57 = vld [vmem:[#allocation2 + $0x70] sm:$0xff]
    %v58 = vld [vmem:[#allocation2 + $0x78] sm:$0xff]
    %v59 = vld [vmem:[#allocation2 + $0x80] sm:$0xff]
    %v60 = vld [vmem:[#allocation2 + $0x88] sm:$0xff]
    %v61 = vld [vmem:[#allocation2 + $0x90] sm:$0xff]
    %v62 = vld [vmem:[#allocation2 + $0x98] sm:$0xff]
    %v63 = vld [vmem:[#allocation2 + $0xa0] sm:$0xff]
    %v64 = vld [vmem:[#allocation2 + $0xa8] sm:$0xff]
    %v65 = vld [vmem:[#allocation2 + $0xb0] sm:$0xff]
    %v66 = vld [vmem:[#allocation2 + $0xb8] sm:$0xff]
    %v67 = vld [vmem:[#allocation2 + $0xc0] sm:$0xff]
    %v68 = vld [vmem:[#allocation2 + $0xc8] sm:$0xff]
    %v69 = vld [vmem:[#allocation2 + $0xd0] sm:$0xff]
    %v70 = vld [vmem:[#allocation2 + $0xd8] sm:$0xff]
    %v71 = vld [vmem:[#allocation2 + $0xe0] sm:$0xff]
    %v72 = vld [vmem:[#allocation2 + $0xe8] sm:$0xff]
    %v73 = vld [vmem:[#allocation2 + $0xf0] sm:$0xff]
    %v74 = vld [vmem:[#allocation2 + $0xf8] sm:$0xff]
    %v75 = vpack.c.bf16 %v47, %v43
    %v76 = vpack.c.bf16 %v48, %v44
    %v77 = vpack.c.bf16 %v49, %v45
    %v78 = vpack.c.bf16 %v50, %v46
    %v79 = vpack.c.bf16 %v55, %v51
    %v80 = vpack.c.bf16 %v56, %v52
    %v81 = vpack.c.bf16 %v57, %v53
    %v82 = vpack.c.bf16 %v58, %v54
    %v83 = vpack.c.bf16 %v63, %v59
    %v84 = vpack.c.bf16 %v64, %v60
    %v85 = vpack.c.bf16 %v65, %v61
    %v86 = vpack.c.bf16 %v66, %v62
    %v87 = vpack.c.bf16 %v71, %v67
    %v88 = vpack.c.bf16 %v72, %v68
    %v89 = vpack.c.bf16 %v73, %v69
    %v90 = vpack.c.bf16 %v74, %v70
    %v91 = vld [vmem:[#allocation5] sm:$0xff]
    %v92 = vld [vmem:[#allocation5 + $0x8] sm:$0xff]
    %v93 = vld [vmem:[#allocation5 + $0x10] sm:$0xff]
    %v94 = vld [vmem:[#allocation5 + $0x18] sm:$0xff]
    %v95 = vld [vmem:[#allocation5 + $0x20] sm:$0xff]
    %v96 = vld [vmem:[#allocation5 + $0x28] sm:$0xff]
    %v97 = vld [vmem:[#allocation5 + $0x30] sm:$0xff]
    %v98 = vld [vmem:[#allocation5 + $0x38] sm:$0xff]
    %v99 = vld [vmem:[#allocation5 + $0x40] sm:$0xff]
    %v100 = vld [vmem:[#allocation5 + $0x48] sm:$0xff]
    %v101 = vld [vmem:[#allocation5 + $0x50] sm:$0xff]
    %v102 = vld [vmem:[#allocation5 + $0x58] sm:$0xff]
    %v103 = vld [vmem:[#allocation5 + $0x60] sm:$0xff]
    %v104 = vld [vmem:[#allocation5 + $0x68] sm:$0xff]
    %v105 = vld [vmem:[#allocation5 + $0x70] sm:$0xff]
    %v106 = vld [vmem:[#allocation5 + $0x78] sm:$0xff]
    %v107 = vld [vmem:[#allocation5 + $0x80] sm:$0xff]
    %v108 = vld [vmem:[#allocation5 + $0x88] sm:$0xff]
    %v109 = vld [vmem:[#allocation5 + $0x90] sm:$0xff]
    %v110 = vld [vmem:[#allocation5 + $0x98] sm:$0xff]
    %v111 = vld [vmem:[#allocation5 + $0xa0] sm:$0xff]
    %v112 = vld [vmem:[#allocation5 + $0xa8] sm:$0xff]
    %v113 = vld [vmem:[#allocation5 + $0xb0] sm:$0xff]
    %v114 = vld [vmem:[#allocation5 + $0xb8] sm:$0xff]
    %v115 = vld [vmem:[#allocation5 + $0xc0] sm:$0xff]
    %v116 = vld [vmem:[#allocation5 + $0xc8] sm:$0xff]
    %v117 = vld [vmem:[#allocation5 + $0xd0] sm:$0xff]
    %v118 = vld [vmem:[#allocation5 + $0xd8] sm:$0xff]
    %v119 = vld [vmem:[#allocation5 + $0xe0] sm:$0xff]
    %v120 = vld [vmem:[#allocation5 + $0xe8] sm:$0xff]
    %v121 = vld [vmem:[#allocation5 + $0xf0] sm:$0xff]
    %v122 = vld [vmem:[#allocation5 + $0xf8] sm:$0xff]
    %v123 = vld [vmem:[#allocation5 + $0x100] sm:$0xff]
    %v124 = vld [vmem:[#allocation5 + $0x108] sm:$0xff]
    %v125 = vld [vmem:[#allocation5 + $0x110] sm:$0xff]
    %v126 = vld [vmem:[#allocation5 + $0x118] sm:$0xff]
    %v127 = vld [vmem:[#allocation5 + $0x120] sm:$0xff]
    %v128 = vld [vmem:[#allocation5 + $0x128] sm:$0xff]
    %v129 = vld [vmem:[#allocation5 + $0x130] sm:$0xff]
    %v130 = vld [vmem:[#allocation5 + $0x138] sm:$0xff]
    %v131 = vld [vmem:[#allocation5 + $0x140] sm:$0xff]
    %v132 = vld [vmem:[#allocation5 + $0x148] sm:$0xff]
    %v133 = vld [vmem:[#allocation5 + $0x150] sm:$0xff]
    %v134 = vld [vmem:[#allocation5 + $0x158] sm:$0xff]
    %v135 = vld [vmem:[#allocation5 + $0x160] sm:$0xff]
    %v136 = vld [vmem:[#allocation5 + $0x168] sm:$0xff]
    %v137 = vld [vmem:[#allocation5 + $0x170] sm:$0xff]
    %v138 = vld [vmem:[#allocation5 + $0x178] sm:$0xff]
    %v139 = vld [vmem:[#allocation5 + $0x180] sm:$0xff]
    %v140 = vld [vmem:[#allocation5 + $0x188] sm:$0xff]
    %v141 = vld [vmem:[#allocation5 + $0x190] sm:$0xff]
    %v142 = vld [vmem:[#allocation5 + $0x198] sm:$0xff]
    %v143 = vld [vmem:[#allocation5 + $0x1a0] sm:$0xff]
    %v144 = vld [vmem:[#allocation5 + $0x1a8] sm:$0xff]
    %v145 = vld [vmem:[#allocation5 + $0x1b0] sm:$0xff]
    %v146 = vld [vmem:[#allocation5 + $0x1b8] sm:$0xff]
    %v147 = vld [vmem:[#allocation5 + $0x1c0] sm:$0xff]
    %v148 = vld [vmem:[#allocation5 + $0x1c8] sm:$0xff]
    %v149 = vld [vmem:[#allocation5 + $0x1d0] sm:$0xff]
    %v150 = vld [vmem:[#allocation5 + $0x1d8] sm:$0xff]
    %v151 = vld [vmem:[#allocation5 + $0x1e0] sm:$0xff]
    %v152 = vld [vmem:[#allocation5 + $0x1e8] sm:$0xff]
    %v153 = vld [vmem:[#allocation5 + $0x1f0] sm:$0xff]
    %v154 = vld [vmem:[#allocation5 + $0x1f8] sm:$0xff]
    %v155 = vld [vmem:[#allocation5 + $0x200] sm:$0xff]
    %v156 = vld [vmem:[#allocation5 + $0x208] sm:$0xff]
    %v157 = vld [vmem:[#allocation5 + $0x210] sm:$0xff]
    %v158 = vld [vmem:[#allocation5 + $0x218] sm:$0xff]
    %v159 = vld [vmem:[#allocation5 + $0x220] sm:$0xff]
    %v160 = vld [vmem:[#allocation5 + $0x228] sm:$0xff]
    %v161 = vld [vmem:[#allocation5 + $0x230] sm:$0xff]
    %v162 = vld [vmem:[#allocation5 + $0x238] sm:$0xff]
    %v163 = vld [vmem:[#allocation5 + $0x240] sm:$0xff]
    %v164 = vld [vmem:[#allocation5 + $0x248] sm:$0xff]
    %v165 = vld [vmem:[#allocation5 + $0x250] sm:$0xff]
    %v166 = vld [vmem:[#allocation5 + $0x258] sm:$0xff]
    %v167 = vld [vmem:[#allocation5 + $0x260] sm:$0xff]
    %v168 = vld [vmem:[#allocation5 + $0x268] sm:$0xff]
    %v169 = vld [vmem:[#allocation5 + $0x270] sm:$0xff]
    %v170 = vld [vmem:[#allocation5 + $0x278] sm:$0xff]
    %v171 = vld [vmem:[#allocation5 + $0x280] sm:$0xff]
    %v172 = vld [vmem:[#allocation5 + $0x288] sm:$0xff]
    %v173 = vld [vmem:[#allocation5 + $0x290] sm:$0xff]
    %v174 = vld [vmem:[#allocation5 + $0x298] sm:$0xff]
    %v175 = vld [vmem:[#allocation5 + $0x2a0] sm:$0xff]
    %v176 = vld [vmem:[#allocation5 + $0x2a8] sm:$0xff]
    %v177 = vld [vmem:[#allocation5 + $0x2b0] sm:$0xff]
    %v178 = vld [vmem:[#allocation5 + $0x2b8] sm:$0xff]
    %v179 = vld [vmem:[#allocation5 + $0x2c0] sm:$0xff]
    %v180 = vld [vmem:[#allocation5 + $0x2c8] sm:$0xff]
    %v181 = vld [vmem:[#allocation5 + $0x2d0] sm:$0xff]
    %v182 = vld [vmem:[#allocation5 + $0x2d8] sm:$0xff]
    %v183 = vld [vmem:[#allocation5 + $0x2e0] sm:$0xff]
    %v184 = vld [vmem:[#allocation5 + $0x2e8] sm:$0xff]
    %v185 = vld [vmem:[#allocation5 + $0x2f0] sm:$0xff]
    %v186 = vld [vmem:[#allocation5 + $0x2f8] sm:$0xff]
    %v187 = vld [vmem:[#allocation5 + $0x300] sm:$0xff]
    %v188 = vld [vmem:[#allocation5 + $0x308] sm:$0xff]
    %v189 = vld [vmem:[#allocation5 + $0x310] sm:$0xff]
    %v190 = vld [vmem:[#allocation5 + $0x318] sm:$0xff]
    %v191 = vld [vmem:[#allocation5 + $0x320] sm:$0xff]
    %v192 = vld [vmem:[#allocation5 + $0x328] sm:$0xff]
    %v193 = vld [vmem:[#allocation5 + $0x330] sm:$0xff]
    %v194 = vld [vmem:[#allocation5 + $0x338] sm:$0xff]
    %v195 = vld [vmem:[#allocation5 + $0x340] sm:$0xff]
    %v196 = vld [vmem:[#allocation5 + $0x348] sm:$0xff]
    %v197 = vld [vmem:[#allocation5 + $0x350] sm:$0xff]
    %v198 = vld [vmem:[#allocation5 + $0x358] sm:$0xff]
    %v199 = vld [vmem:[#allocation5 + $0x360] sm:$0xff]
    %v200 = vld [vmem:[#allocation5 + $0x368] sm:$0xff]
    %v201 = vld [vmem:[#allocation5 + $0x370] sm:$0xff]
    %v202 = vld [vmem:[#allocation5 + $0x378] sm:$0xff]
    %v203 = vld [vmem:[#allocation5 + $0x380] sm:$0xff]
    %v204 = vld [vmem:[#allocation5 + $0x388] sm:$0xff]
    %v205 = vld [vmem:[#allocation5 + $0x390] sm:$0xff]
    %v206 = vld [vmem:[#allocation5 + $0x398] sm:$0xff]
    %v207 = vld [vmem:[#allocation5 + $0x3a0] sm:$0xff]
    %v208 = vld [vmem:[#allocation5 + $0x3a8] sm:$0xff]
    %v209 = vld [vmem:[#allocation5 + $0x3b0] sm:$0xff]
    %v210 = vld [vmem:[#allocation5 + $0x3b8] sm:$0xff]
    %v211 = vld [vmem:[#allocation5 + $0x3c0] sm:$0xff]
    %v212 = vld [vmem:[#allocation5 + $0x3c8] sm:$0xff]
    %v213 = vld [vmem:[#allocation5 + $0x3d0] sm:$0xff]
    %v214 = vld [vmem:[#allocation5 + $0x3d8] sm:$0xff]
    %v215 = vld [vmem:[#allocation5 + $0x3e0] sm:$0xff]
    %v216 = vld [vmem:[#allocation5 + $0x3e8] sm:$0xff]
    %v217 = vld [vmem:[#allocation5 + $0x3f0] sm:$0xff]
    %v218 = vld [vmem:[#allocation5 + $0x3f8] sm:$0xff]
    %v347 = vunpack.c.l.b16 %v91
    %v348 = vunpack.c.h.b16 %v91
    %v349 = vunpack.c.l.b16 %v92
    %v350 = vunpack.c.h.b16 %v92
    %v351 = vunpack.c.l.b16 %v93
    %v352 = vunpack.c.h.b16 %v93
    %v353 = vunpack.c.l.b16 %v94
    %v354 = vunpack.c.h.b16 %v94
    %v355 = vunpack.c.l.b16 %v95
    %v356 = vunpack.c.h.b16 %v95
    %v357 = vunpack.c.l.b16 %v96
    %v358 = vunpack.c.h.b16 %v96
    %v359 = vunpack.c.l.b16 %v97
    %v360 = vunpack.c.h.b16 %v97
    %v361 = vunpack.c.l.b16 %v98
    %v362 = vunpack.c.h.b16 %v98
    %v363 = vunpack.c.l.b16 %v99
    %v364 = vunpack.c.h.b16 %v99
    %v365 = vunpack.c.l.b16 %v100
    %v366 = vunpack.c.h.b16 %v100
    %v367 = vunpack.c.l.b16 %v101
    %v368 = vunpack.c.h.b16 %v101
    %v369 = vunpack.c.l.b16 %v102
    %v370 = vunpack.c.h.b16 %v102
    %v371 = vunpack.c.l.b16 %v103
    %v372 = vunpack.c.h.b16 %v103
    %v373 = vunpack.c.l.b16 %v104
    %v374 = vunpack.c.h.b16 %v104
    %v375 = vunpack.c.l.b16 %v105
    %v376 = vunpack.c.h.b16 %v105
    %v377 = vunpack.c.l.b16 %v106
    %v378 = vunpack.c.h.b16 %v106
    %v379 = vunpack.c.l.b16 %v107
    %v380 = vunpack.c.h.b16 %v107
    %v381 = vunpack.c.l.b16 %v108
    %v382 = vunpack.c.h.b16 %v108
    %v383 = vunpack.c.l.b16 %v109
    %v384 = vunpack.c.h.b16 %v109
    %v385 = vunpack.c.l.b16 %v110
    %v386 = vunpack.c.h.b16 %v110
    %v387 = vunpack.c.l.b16 %v111
    %v388 = vunpack.c.h.b16 %v111
    %v389 = vunpack.c.l.b16 %v112
    %v390 = vunpack.c.h.b16 %v112
    %v391 = vunpack.c.l.b16 %v113
    %v392 = vunpack.c.h.b16 %v113
    %v393 = vunpack.c.l.b16 %v114
    %v394 = vunpack.c.h.b16 %v114
    %v395 = vunpack.c.l.b16 %v115
    %v396 = vunpack.c.h.b16 %v115
    %v397 = vunpack.c.l.b16 %v116
    %v398 = vunpack.c.h.b16 %v116
    %v399 = vunpack.c.l.b16 %v117
    %v400 = vunpack.c.h.b16 %v117
    %v401 = vunpack.c.l.b16 %v118
    %v402 = vunpack.c.h.b16 %v118
    %v403 = vunpack.c.l.b16 %v119
    %v404 = vunpack.c.h.b16 %v119
    %v405 = vunpack.c.l.b16 %v120
    %v406 = vunpack.c.h.b16 %v120
    %v407 = vunpack.c.l.b16 %v121
    %v408 = vunpack.c.h.b16 %v121
    %v409 = vunpack.c.l.b16 %v122
    %v410 = vunpack.c.h.b16 %v122
    %v411 = vunpack.c.l.b16 %v123
    %v412 = vunpack.c.h.b16 %v123
    %v413 = vunpack.c.l.b16 %v124
    %v414 = vunpack.c.h.b16 %v124
    %v415 = vunpack.c.l.b16 %v125
    %v416 = vunpack.c.h.b16 %v125
    %v417 = vunpack.c.l.b16 %v126
    %v418 = vunpack.c.h.b16 %v126
    %v419 = vunpack.c.l.b16 %v127
    %v420 = vunpack.c.h.b16 %v127
    %v421 = vunpack.c.l.b16 %v128
    %v422 = vunpack.c.h.b16 %v128
    %v423 = vunpack.c.l.b16 %v129
    %v424 = vunpack.c.h.b16 %v129
    %v425 = vunpack.c.l.b16 %v130
    %v426 = vunpack.c.h.b16 %v130
    %v427 = vunpack.c.l.b16 %v131
    %v428 = vunpack.c.h.b16 %v131
    %v429 = vunpack.c.l.b16 %v132
    %v430 = vunpack.c.h.b16 %v132
    %v431 = vunpack.c.l.b16 %v133
    %v432 = vunpack.c.h.b16 %v133
    %v433 = vunpack.c.l.b16 %v134
    %v434 = vunpack.c.h.b16 %v134
    %v435 = vunpack.c.l.b16 %v135
    %v436 = vunpack.c.h.b16 %v135
    %v437 = vunpack.c.l.b16 %v136
    %v438 = vunpack.c.h.b16 %v136
    %v439 = vunpack.c.l.b16 %v137
    %v440 = vunpack.c.h.b16 %v137
    %v441 = vunpack.c.l.b16 %v138
    %v442 = vunpack.c.h.b16 %v138
    %v443 = vunpack.c.l.b16 %v139
    %v444 = vunpack.c.h.b16 %v139
    %v445 = vunpack.c.l.b16 %v140
    %v446 = vunpack.c.h.b16 %v140
    %v447 = vunpack.c.l.b16 %v141
    %v448 = vunpack.c.h.b16 %v141
    %v449 = vunpack.c.l.b16 %v142
    %v450 = vunpack.c.h.b16 %v142
    %v451 = vunpack.c.l.b16 %v143
    %v452 = vunpack.c.h.b16 %v143
    %v453 = vunpack.c.l.b16 %v144
    %v454 = vunpack.c.h.b16 %v144
    %v455 = vunpack.c.l.b16 %v145
    %v456 = vunpack.c.h.b16 %v145
    %v457 = vunpack.c.l.b16 %v146
    %v458 = vunpack.c.h.b16 %v146
    %v459 = vunpack.c.l.b16 %v147
    %v460 = vunpack.c.h.b16 %v147
    %v461 = vunpack.c.l.b16 %v148
    %v462 = vunpack.c.h.b16 %v148
    %v463 = vunpack.c.l.b16 %v149
    %v464 = vunpack.c.h.b16 %v149
    %v465 = vunpack.c.l.b16 %v150
    %v466 = vunpack.c.h.b16 %v150
    %v467 = vunpack.c.l.b16 %v151
    %v468 = vunpack.c.h.b16 %v151
    %v469 = vunpack.c.l.b16 %v152
    %v470 = vunpack.c.h.b16 %v152
    %v471 = vunpack.c.l.b16 %v153
    %v472 = vunpack.c.h.b16 %v153
    %v473 = vunpack.c.l.b16 %v154
    %v474 = vunpack.c.h.b16 %v154
    %v475 = vunpack.c.l.b16 %v155
    %v476 = vunpack.c.h.b16 %v155
    %v477 = vunpack.c.l.b16 %v156
    %v478 = vunpack.c.h.b16 %v156
    %v479 = vunpack.c.l.b16 %v157
    %v480 = vunpack.c.h.b16 %v157
    %v481 = vunpack.c.l.b16 %v158
    %v482 = vunpack.c.h.b16 %v158
    %v483 = vunpack.c.l.b16 %v159
    %v484 = vunpack.c.h.b16 %v159
    %v485 = vunpack.c.l.b16 %v160
    %v486 = vunpack.c.h.b16 %v160
    %v487 = vunpack.c.l.b16 %v161
    %v488 = vunpack.c.h.b16 %v161
    %v489 = vunpack.c.l.b16 %v162
    %v490 = vunpack.c.h.b16 %v162
    %v491 = vunpack.c.l.b16 %v163
    %v492 = vunpack.c.h.b16 %v163
    %v493 = vunpack.c.l.b16 %v164
    %v494 = vunpack.c.h.b16 %v164
    %v495 = vunpack.c.l.b16 %v165
    %v496 = vunpack.c.h.b16 %v165
    %v497 = vunpack.c.l.b16 %v166
    %v498 = vunpack.c.h.b16 %v166
    %v499 = vunpack.c.l.b16 %v167
    %v500 = vunpack.c.h.b16 %v167
    %v501 = vunpack.c.l.b16 %v168
    %v502 = vunpack.c.h.b16 %v168
    %v503 = vunpack.c.l.b16 %v169
    %v504 = vunpack.c.h.b16 %v169
    %v505 = vunpack.c.l.b16 %v170
    %v506 = vunpack.c.h.b16 %v170
    %v507 = vunpack.c.l.b16 %v171
    %v508 = vunpack.c.h.b16 %v171
    %v509 = vunpack.c.l.b16 %v172
    %v510 = vunpack.c.h.b16 %v172
    %v511 = vunpack.c.l.b16 %v173
    %v512 = vunpack.c.h.b16 %v173
    %v513 = vunpack.c.l.b16 %v174
    %v514 = vunpack.c.h.b16 %v174
    %v515 = vunpack.c.l.b16 %v175
    %v516 = vunpack.c.h.b16 %v175
    %v517 = vunpack.c.l.b16 %v176
    %v518 = vunpack.c.h.b16 %v176
    %v519 = vunpack.c.l.b16 %v177
    %v520 = vunpack.c.h.b16 %v177
    %v521 = vunpack.c.l.b16 %v178
    %v522 = vunpack.c.h.b16 %v178
    %v523 = vunpack.c.l.b16 %v179
    %v524 = vunpack.c.h.b16 %v179
    %v525 = vunpack.c.l.b16 %v180
    %v526 = vunpack.c.h.b16 %v180
    %v527 = vunpack.c.l.b16 %v181
    %v528 = vunpack.c.h.b16 %v181
    %v529 = vunpack.c.l.b16 %v182
    %v530 = vunpack.c.h.b16 %v182
    %v531 = vunpack.c.l.b16 %v183
    %v532 = vunpack.c.h.b16 %v183
    %v533 = vunpack.c.l.b16 %v184
    %v534 = vunpack.c.h.b16 %v184
    %v535 = vunpack.c.l.b16 %v185
    %v536 = vunpack.c.h.b16 %v185
    %v537 = vunpack.c.l.b16 %v186
    %v538 = vunpack.c.h.b16 %v186
    %v539 = vunpack.c.l.b16 %v187
    %v540 = vunpack.c.h.b16 %v187
    %v541 = vunpack.c.l.b16 %v188
    %v542 = vunpack.c.h.b16 %v188
    %v543 = vunpack.c.l.b16 %v189
    %v544 = vunpack.c.h.b16 %v189
    %v545 = vunpack.c.l.b16 %v190
    %v546 = vunpack.c.h.b16 %v190
    %v547 = vunpack.c.l.b16 %v191
    %v548 = vunpack.c.h.b16 %v191
    %v549 = vunpack.c.l.b16 %v192
    %v550 = vunpack.c.h.b16 %v192
    %v551 = vunpack.c.l.b16 %v193
    %v552 = vunpack.c.h.b16 %v193
    %v553 = vunpack.c.l.b16 %v194
    %v554 = vunpack.c.h.b16 %v194
    %v555 = vunpack.c.l.b16 %v195
    %v556 = vunpack.c.h.b16 %v195
    %v557 = vunpack.c.l.b16 %v196
    %v558 = vunpack.c.h.b16 %v196
    %v559 = vunpack.c.l.b16 %v197
    %v560 = vunpack.c.h.b16 %v197
    %v561 = vunpack.c.l.b16 %v198
    %v562 = vunpack.c.h.b16 %v198
    %v563 = vunpack.c.l.b16 %v199
    %v564 = vunpack.c.h.b16 %v199
    %v565 = vunpack.c.l.b16 %v200
    %v566 = vunpack.c.h.b16 %v200
    %v567 = vunpack.c.l.b16 %v201
    %v568 = vunpack.c.h.b16 %v201
    %v569 = vunpack.c.l.b16 %v202
    %v570 = vunpack.c.h.b16 %v202
    %v571 = vunpack.c.l.b16 %v203
    %v572 = vunpack.c.h.b16 %v203
    %v573 = vunpack.c.l.b16 %v204
    %v574 = vunpack.c.h.b16 %v204
    %v575 = vunpack.c.l.b16 %v205
    %v576 = vunpack.c.h.b16 %v205
    %v577 = vunpack.c.l.b16 %v206
    %v578 = vunpack.c.h.b16 %v206
    %v579 = vunpack.c.l.b16 %v207
    %v580 = vunpack.c.h.b16 %v207
    %v581 = vunpack.c.l.b16 %v208
    %v582 = vunpack.c.h.b16 %v208
    %v583 = vunpack.c.l.b16 %v209
    %v584 = vunpack.c.h.b16 %v209
    %v585 = vunpack.c.l.b16 %v210
    %v586 = vunpack.c.h.b16 %v210
    %v587 = vunpack.c.l.b16 %v211
    %v588 = vunpack.c.h.b16 %v211
    %v589 = vunpack.c.l.b16 %v212
    %v590 = vunpack.c.h.b16 %v212
    %v591 = vunpack.c.l.b16 %v213
    %v592 = vunpack.c.h.b16 %v213
    %v593 = vunpack.c.l.b16 %v214
    %v594 = vunpack.c.h.b16 %v214
    %v595 = vunpack.c.l.b16 %v215
    %v596 = vunpack.c.h.b16 %v215
    %v597 = vunpack.c.l.b16 %v216
    %v598 = vunpack.c.h.b16 %v216
    %v599 = vunpack.c.l.b16 %v217
    %v600 = vunpack.c.h.b16 %v217
    %v601 = vunpack.c.l.b16 %v218
    %v602 = vunpack.c.h.b16 %v218
    %v603 = vpack.c.b16 %v351, %v347
    %v604 = vpack.c.b16 %v352, %v348
    %v605 = vpack.c.b16 %v353, %v349
    %v606 = vpack.c.b16 %v354, %v350
    %v607 = vpack.c.b16 %v359, %v355
    %v608 = vpack.c.b16 %v360, %v356
    %v609 = vpack.c.b16 %v361, %v357
    %v610 = vpack.c.b16 %v362, %v358
    %v611 = vpack.c.b16 %v367, %v363
    %v612 = vpack.c.b16 %v368, %v364
    %v613 = vpack.c.b16 %v369, %v365
    %v614 = vpack.c.b16 %v370, %v366
    %v615 = vpack.c.b16 %v375, %v371
    %v616 = vpack.c.b16 %v376, %v372
    %v617 = vpack.c.b16 %v377, %v373
    %v618 = vpack.c.b16 %v378, %v374
    %v619 = vpack.c.b16 %v383, %v379
    %v620 = vpack.c.b16 %v384, %v380
    %v621 = vpack.c.b16 %v385, %v381
    %v622 = vpack.c.b16 %v386, %v382
    %v623 = vpack.c.b16 %v391, %v387
    %v624 = vpack.c.b16 %v392, %v388
    %v625 = vpack.c.b16 %v393, %v389
    %v626 = vpack.c.b16 %v394, %v390
    %v627 = vpack.c.b16 %v399, %v395
    %v628 = vpack.c.b16 %v400, %v396
    %v629 = vpack.c.b16 %v401, %v397
    %v630 = vpack.c.b16 %v402, %v398
    %v631 = vpack.c.b16 %v407, %v403
    %v632 = vpack.c.b16 %v408, %v404
    %v633 = vpack.c.b16 %v409, %v405
    %v634 = vpack.c.b16 %v410, %v406
    %v635 = vpack.c.b16 %v415, %v411
    %v636 = vpack.c.b16 %v416, %v412
    %v637 = vpack.c.b16 %v417, %v413
    %v638 = vpack.c.b16 %v418, %v414
    %v639 = vpack.c.b16 %v423, %v419
    %v640 = vpack.c.b16 %v424, %v420
    %v641 = vpack.c.b16 %v425, %v421
    %v642 = vpack.c.b16 %v426, %v422
    %v643 = vpack.c.b16 %v431, %v427
    %v644 = vpack.c.b16 %v432, %v428
    %v645 = vpack.c.b16 %v433, %v429
    %v646 = vpack.c.b16 %v434, %v430
    %v647 = vpack.c.b16 %v439, %v435
    %v648 = vpack.c.b16 %v440, %v436
    %v649 = vpack.c.b16 %v441, %v437
    %v650 = vpack.c.b16 %v442, %v438
    %v651 = vpack.c.b16 %v447, %v443
    %v652 = vpack.c.b16 %v448, %v444
    %v653 = vpack.c.b16 %v449, %v445
    %v654 = vpack.c.b16 %v450, %v446
    %v655 = vpack.c.b16 %v455, %v451
    %v656 = vpack.c.b16 %v456, %v452
    %v657 = vpack.c.b16 %v457, %v453
    %v658 = vpack.c.b16 %v458, %v454
    %v659 = vpack.c.b16 %v463, %v459
    %v660 = vpack.c.b16 %v464, %v460
    %v661 = vpack.c.b16 %v465, %v461
    %v662 = vpack.c.b16 %v466, %v462
    %v663 = vpack.c.b16 %v471, %v467
    %v664 = vpack.c.b16 %v472, %v468
    %v665 = vpack.c.b16 %v473, %v469
    %v666 = vpack.c.b16 %v474, %v470
    %v667 = vpack.c.b16 %v479, %v475
    %v668 = vpack.c.b16 %v480, %v476
    %v669 = vpack.c.b16 %v481, %v477
    %v670 = vpack.c.b16 %v482, %v478
    %v671 = vpack.c.b16 %v487, %v483
    %v672 = vpack.c.b16 %v488, %v484
    %v673 = vpack.c.b16 %v489, %v485
    %v674 = vpack.c.b16 %v490, %v486
    %v675 = vpack.c.b16 %v495, %v491
    %v676 = vpack.c.b16 %v496, %v492
    %v677 = vpack.c.b16 %v497, %v493
    %v678 = vpack.c.b16 %v498, %v494
    %v679 = vpack.c.b16 %v503, %v499
    %v680 = vpack.c.b16 %v504, %v500
    %v681 = vpack.c.b16 %v505, %v501
    %v682 = vpack.c.b16 %v506, %v502
    %v683 = vpack.c.b16 %v511, %v507
    %v684 = vpack.c.b16 %v512, %v508
    %v685 = vpack.c.b16 %v513, %v509
    %v686 = vpack.c.b16 %v514, %v510
    %v687 = vpack.c.b16 %v519, %v515
    %v688 = vpack.c.b16 %v520, %v516
    %v689 = vpack.c.b16 %v521, %v517
    %v690 = vpack.c.b16 %v522, %v518
    %v691 = vpack.c.b16 %v527, %v523
    %v692 = vpack.c.b16 %v528, %v524
    %v693 = vpack.c.b16 %v529, %v525
    %v694 = vpack.c.b16 %v530, %v526
    %v695 = vpack.c.b16 %v535, %v531
    %v696 = vpack.c.b16 %v536, %v532
    %v697 = vpack.c.b16 %v537, %v533
    %v698 = vpack.c.b16 %v538, %v534
    %v699 = vpack.c.b16 %v543, %v539
    %v700 = vpack.c.b16 %v544, %v540
    %v701 = vpack.c.b16 %v545, %v541
    %v702 = vpack.c.b16 %v546, %v542
    %v703 = vpack.c.b16 %v551, %v547
    %v704 = vpack.c.b16 %v552, %v548
    %v705 = vpack.c.b16 %v553, %v549
    %v706 = vpack.c.b16 %v554, %v550
    %v707 = vpack.c.b16 %v559, %v555
    %v708 = vpack.c.b16 %v560, %v556
    %v709 = vpack.c.b16 %v561, %v557
    %v710 = vpack.c.b16 %v562, %v558
    %v711 = vpack.c.b16 %v567, %v563
    %v712 = vpack.c.b16 %v568, %v564
    %v713 = vpack.c.b16 %v569, %v565
    %v714 = vpack.c.b16 %v570, %v566
    %v715 = vpack.c.b16 %v575, %v571
    %v716 = vpack.c.b16 %v576, %v572
    %v717 = vpack.c.b16 %v577, %v573
    %v718 = vpack.c.b16 %v578, %v574
    %v719 = vpack.c.b16 %v583, %v579
    %v720 = vpack.c.b16 %v584, %v580
    %v721 = vpack.c.b16 %v585, %v581
    %v722 = vpack.c.b16 %v586, %v582
    %v723 = vpack.c.b16 %v591, %v587
    %v724 = vpack.c.b16 %v592, %v588
    %v725 = vpack.c.b16 %v593, %v589
    %v726 = vpack.c.b16 %v594, %v590
    %v727 = vpack.c.b16 %v599, %v595
    %v728 = vpack.c.b16 %v600, %v596
    %v729 = vpack.c.b16 %v601, %v597
    %v730 = vpack.c.b16 %v602, %v598
    %859 = vmatprep.subr.bf16.mxu0 %v604
    %860 = vmatpush1.bf16.msra.mxu0 %v603
    %861 = vmatprep.subr.bf16.mxu0 %v608
    %862 = vmatpush1.bf16.msra.mxu0 %v607
    %863 = vmatprep.subr.bf16.mxu0 %v612
    %864 = vmatpush1.bf16.msra.mxu0 %v611
    %865 = vmatprep.subr.bf16.mxu0 %v616
    %866 = vmatpush1.bf16.msra.mxu0 %v615
    %867 = vmatprep.subr.bf16.mxu0 %v620
    %868 = vmatpush1.bf16.msra.mxu0 %v619
    %869 = vmatprep.subr.bf16.mxu0 %v624
    %870 = vmatpush1.bf16.msra.mxu0 %v623
    %871 = vmatprep.subr.bf16.mxu0 %v628
    %872 = vmatpush1.bf16.msra.mxu0 %v627
    %873 = vmatprep.subr.bf16.mxu0 %v632
    %874 = vmatpush1.bf16.msra.mxu0 %v631
    %875 = vmatprep.subr.bf16.mxu0 %v636
    %876 = vmatpush1.bf16.msra.mxu0 %v635
    %877 = vmatprep.subr.bf16.mxu0 %v640
    %878 = vmatpush1.bf16.msra.mxu0 %v639
    %879 = vmatprep.subr.bf16.mxu0 %v644
    %880 = vmatpush1.bf16.msra.mxu0 %v643
    %881 = vmatprep.subr.bf16.mxu0 %v648
    %882 = vmatpush1.bf16.msra.mxu0 %v647
    %883 = vmatprep.subr.bf16.mxu0 %v652
    %884 = vmatpush1.bf16.msra.mxu0 %v651
    %885 = vmatprep.subr.bf16.mxu0 %v656
    %886 = vmatpush1.bf16.msra.mxu0 %v655
    %887 = vmatprep.subr.bf16.mxu0 %v660
    %888 = vmatpush1.bf16.msra.mxu0 %v659
    %889 = vmatprep.subr.bf16.mxu0 %v664
    %890 = vmatpush1.bf16.msra.mxu0 %v663
    %891 = vmatprep.mubr.bf16.mxu0 %v76
    %892 = vmatmul.mubr.bf16.gmra.mrb[0].mxu0 %v75
    %v893 = vpop.f32.mrb[0].mxu0
    %v894 = vadd.f32 0.0, %v893
    %v895 = vpop.f32.mrb[0].mxu0
    %v896 = vadd.f32 0.0, %v895
    %v897 = vpop.f32.mrb[0].mxu0
    %v898 = vadd.f32 0.0, %v897
    %v899 = vpop.f32.mrb[0].mxu0
    %v900 = vadd.f32 0.0, %v899
    %901 = vmatprep.mubr.bf16.mxu0 %v80
    %902 = vmatmul.mubr.bf16.gmra.mrb[0].mxu0 %v79
    %v903 = vpop.f32.mrb[0].mxu0
    %v904 = vadd.f32 0.0, %v903
    %v905 = vpop.f32.mrb[0].mxu0
    %v906 = vadd.f32 0.0, %v905
    %v907 = vpop.f32.mrb[0].mxu0
    %v908 = vadd.f32 0.0, %v907
    %v909 = vpop.f32.mrb[0].mxu0
    %v910 = vadd.f32 0.0, %v909
    %911 = vmatprep.mubr.bf16.mxu0 %v84
    %912 = vmatmul.mubr.bf16.gmra.mrb[0].mxu0 %v83
    %v913 = vpop.f32.mrb[0].mxu0
    %v914 = vadd.f32 0.0, %v913
    %v915 = vpop.f32.mrb[0].mxu0
    %v916 = vadd.f32 0.0, %v915
    %v917 = vpop.f32.mrb[0].mxu0
    %v918 = vadd.f32 0.0, %v917
    %v919 = vpop.f32.mrb[0].mxu0
    %v920 = vadd.f32 0.0, %v919
    %921 = vmatprep.mubr.bf16.mxu0 %v88
    %922 = vmatmul.mubr.bf16.gmra.mrb[0].mxu0 %v87
    %v923 = vpop.f32.mrb[0].mxu0
    %v924 = vadd.f32 0.0, %v923
    %v925 = vpop.f32.mrb[0].mxu0
    %v926 = vadd.f32 0.0, %v925
    %v927 = vpop.f32.mrb[0].mxu0
    %v928 = vadd.f32 0.0, %v927
    %v929 = vpop.f32.mrb[0].mxu0
    %v930 = vadd.f32 0.0, %v929
    %931 = vdwg.mxu0
    %932 = vmatprep.subr.bf16.mxu0 %v668
    %933 = vmatpush1.bf16.msra.mxu0 %v667
    %934 = vmatprep.subr.bf16.mxu0 %v672
    %935 = vmatpush1.bf16.msra.mxu0 %v671
    %936 = vmatprep.subr.bf16.mxu0 %v676
    %937 = vmatpush1.bf16.msra.mxu0 %v675
    %938 = vmatprep.subr.bf16.mxu0 %v680
    %939 = vmatpush1.bf16.msra.mxu0 %v679
    %940 = vmatprep.subr.bf16.mxu0 %v684
    %941 = vmatpush1.bf16.msra.mxu0 %v683
    %942 = vmatprep.subr.bf16.mxu0 %v688
    %943 = vmatpush1.bf16.msra.mxu0 %v687
    %944 = vmatprep.subr.bf16.mxu0 %v692
    %945 = vmatpush1.bf16.msra.mxu0 %v691
    %946 = vmatprep.subr.bf16.mxu0 %v696
    %947 = vmatpush1.bf16.msra.mxu0 %v695
    %948 = vmatprep.subr.bf16.mxu0 %v700
    %949 = vmatpush1.bf16.msra.mxu0 %v699
    %950 = vmatprep.subr.bf16.mxu0 %v704
    %951 = vmatpush1.bf16.msra.mxu0 %v703
    %952 = vmatprep.subr.bf16.mxu0 %v708
    %953 = vmatpush1.bf16.msra.mxu0 %v707
    %954 = vmatprep.subr.bf16.mxu0 %v712
    %955 = vmatpush1.bf16.msra.mxu0 %v711
    %956 = vmatprep.subr.bf16.mxu0 %v716
    %957 = vmatpush1.bf16.msra.mxu0 %v715
    %958 = vmatprep.subr.bf16.mxu0 %v720
    %959 = vmatpush1.bf16.msra.mxu0 %v719
    %960 = vmatprep.subr.bf16.mxu0 %v724
    %961 = vmatpush1.bf16.msra.mxu0 %v723
    %962 = vmatprep.subr.bf16.mxu0 %v728
    %963 = vmatpush1.bf16.msra.mxu0 %v727
    %964 = vmatprep.mubr.bf16.mxu0 %v78
    %965 = vmatmul.mubr.bf16.gmra.mrb[0].mxu0 %v77
    %v966 = vpop.f32.mrb[0].mxu0
    %v967 = vadd.f32 %v894, %v966
    %v968 = vpop.f32.mrb[0].mxu0
    %v969 = vadd.f32 %v896, %v968
    %v970 = vpop.f32.mrb[0].mxu0
    %v971 = vadd.f32 %v898, %v970
    %v972 = vpop.f32.mrb[0].mxu0
    %v973 = vadd.f32 %v900, %v972
    %974 = vmatprep.mubr.bf16.mxu0 %v82
    %975 = vmatmul.mubr.bf16.gmra.mrb[0].mxu0 %v81
    %v976 = vpop.f32.mrb[0].mxu0
    %v977 = vadd.f32 %v904, %v976
    %v978 = vpop.f32.mrb[0].mxu0
    %v979 = vadd.f32 %v906, %v978
    %v980 = vpop.f32.mrb[0].mxu0
    %v981 = vadd.f32 %v908, %v980
    %v982 = vpop.f32.mrb[0].mxu0
    %v983 = vadd.f32 %v910, %v982
    %984 = vmatprep.mubr.bf16.mxu0 %v86
    %985 = vmatmul.mubr.bf16.gmra.mrb[0].mxu0 %v85
    %v986 = vpop.f32.mrb[0].mxu0
    %v987 = vadd.f32 %v914, %v986
    %v988 = vpop.f32.mrb[0].mxu0
    %v989 = vadd.f32 %v916, %v988
    %v990 = vpop.f32.mrb[0].mxu0
    %v991 = vadd.f32 %v918, %v990
    %v992 = vpop.f32.mrb[0].mxu0
    %v993 = vadd.f32 %v920, %v992
    %994 = vmatprep.mubr.bf16.mxu0 %v90
    %995 = vmatmul.mubr.bf16.gmra.mrb[0].mxu0 %v89
    %v996 = vpop.f32.mrb[0].mxu0
    %v997 = vadd.f32 %v924, %v996
    %v998 = vpop.f32.mrb[0].mxu0
    %v999 = vadd.f32 %v926, %v998
    %v1000 = vpop.f32.mrb[0].mxu0
    %v1001 = vadd.f32 %v928, %v1000
    %v1002 = vpop.f32.mrb[0].mxu0
    %v1003 = vadd.f32 %v930, %v1002
    %1004 = vdwg.mxu0
    %1005 = vmatprep.subr.bf16.mxu0 %v606
    %1006 = vmatpush1.bf16.msra.mxu0 %v605
    %1007 = vmatprep.subr.bf16.mxu0 %v610
    %1008 = vmatpush1.bf16.msra.mxu0 %v609
    %1009 = vmatprep.subr.bf16.mxu0 %v614
    %1010 = vmatpush1.bf16.msra.mxu0 %v613
    %1011 = vmatprep.subr.bf16.mxu0 %v618
    %1012 = vmatpush1.bf16.msra.mxu0 %v617
    %1013 = vmatprep.subr.bf16.mxu0 %v622
    %1014 = vmatpush1.bf16.msra.mxu0 %v621
    %1015 = vmatprep.subr.bf16.mxu0 %v626
    %1016 = vmatpush1.bf16.msra.mxu0 %v625
    %1017 = vmatprep.subr.bf16.mxu0 %v630
    %1018 = vmatpush1.bf16.msra.mxu0 %v629
    %1019 = vmatprep.subr.bf16.mxu0 %v634
    %1020 = vmatpush1.bf16.msra.mxu0 %v633
    %1021 = vmatprep.subr.bf16.mxu0 %v638
    %1022 = vmatpush1.bf16.msra.mxu0 %v637
    %1023 = vmatprep.subr.bf16.mxu0 %v642
    %1024 = vmatpush1.bf16.msra.mxu0 %v641
    %1025 = vmatprep.subr.bf16.mxu0 %v646
    %1026 = vmatpush1.bf16.msra.mxu0 %v645
    %1027 = vmatprep.subr.bf16.mxu0 %v650
    %1028 = vmatpush1.bf16.msra.mxu0 %v649
    %1029 = vmatprep.subr.bf16.mxu0 %v654
    %1030 = vmatpush1.bf16.msra.mxu0 %v653
    %1031 = vmatprep.subr.bf16.mxu0 %v658
    %1032 = vmatpush1.bf16.msra.mxu0 %v657
    %1033 = vmatprep.subr.bf16.mxu0 %v662
    %1034 = vmatpush1.bf16.msra.mxu0 %v661
    %1035 = vmatprep.subr.bf16.mxu0 %v666
    %1036 = vmatpush1.bf16.msra.mxu0 %v665
    %1037 = vmatprep.mubr.bf16.mxu0 %v76
    %1038 = vmatmul.mubr.bf16.gmra.mrb[0].mxu0 %v75
    %v1039 = vpop.f32.mrb[0].mxu0
    %v1040 = vadd.f32 0.0, %v1039
    %v1041 = vpop.f32.mrb[0].mxu0
    %v1042 = vadd.f32 0.0, %v1041
    %v1043 = vpop.f32.mrb[0].mxu0
    %v1044 = vadd.f32 0.0, %v1043
    %v1045 = vpop.f32.mrb[0].mxu0
    %v1046 = vadd.f32 0.0, %v1045
    %1047 = vmatprep.mubr.bf16.mxu0 %v80
    %1048 = vmatmul.mubr.bf16.gmra.mrb[0].mxu0 %v79
    %v1049 = vpop.f32.mrb[0].mxu0
    %v1050 = vadd.f32 0.0, %v1049
    %v1051 = vpop.f32.mrb[0].mxu0
    %v1052 = vadd.f32 0.0, %v1051
    %v1053 = vpop.f32.mrb[0].mxu0
    %v1054 = vadd.f32 0.0, %v1053
    %v1055 = vpop.f32.mrb[0].mxu0
    %v1056 = vadd.f32 0.0, %v1055
    %1057 = vmatprep.mubr.bf16.mxu0 %v84
    %1058 = vmatmul.mubr.bf16.gmra.mrb[0].mxu0 %v83
    %v1059 = vpop.f32.mrb[0].mxu0
    %v1060 = vadd.f32 0.0, %v1059
    %v1061 = vpop.f32.mrb[0].mxu0
    %v1062 = vadd.f32 0.0, %v1061
    %v1063 = vpop.f32.mrb[0].mxu0
    %v1064 = vadd.f32 0.0, %v1063
    %v1065 = vpop.f32.mrb[0].mxu0
    %v1066 = vadd.f32 0.0, %v1065
    %1067 = vmatprep.mubr.bf16.mxu0 %v88
    %1068 = vmatmul.mubr.bf16.gmra.mrb[0].mxu0 %v87
    %v1069 = vpop.f32.mrb[0].mxu0
    %v1070 = vadd.f32 0.0, %v1069
    %v1071 = vpop.f32.mrb[0].mxu0
    %v1072 = vadd.f32 0.0, %v1071
    %v1073 = vpop.f32.mrb[0].mxu0
    %v1074 = vadd.f32 0.0, %v1073
    %v1075 = vpop.f32.mrb[0].mxu0
    %v1076 = vadd.f32 0.0, %v1075
    %1077 = vdwg.mxu0
    %1078 = vmatprep.subr.bf16.mxu0 %v670
    %1079 = vmatpush1.bf16.msra.mxu0 %v669
    %1080 = vmatprep.subr.bf16.mxu0 %v674
    %1081 = vmatpush1.bf16.msra.mxu0 %v673
    %1082 = vmatprep.subr.bf16.mxu0 %v678
    %1083 = vmatpush1.bf16.msra.mxu0 %v677
    %1084 = vmatprep.subr.bf16.mxu0 %v682
    %1085 = vmatpush1.bf16.msra.mxu0 %v681
    %1086 = vmatprep.subr.bf16.mxu0 %v686
    %1087 = vmatpush1.bf16.msra.mxu0 %v685
    %1088 = vmatprep.subr.bf16.mxu0 %v690
    %1089 = vmatpush1.bf16.msra.mxu0 %v689
    %1090 = vmatprep.subr.bf16.mxu0 %v694
    %1091 = vmatpush1.bf16.msra.mxu0 %v693
    %1092 = vmatprep.subr.bf16.mxu0 %v698
    %1093 = vmatpush1.bf16.msra.mxu0 %v697
    %1094 = vmatprep.subr.bf16.mxu0 %v702
    %1095 = vmatpush1.bf16.msra.mxu0 %v701
    %1096 = vmatprep.subr.bf16.mxu0 %v706
    %1097 = vmatpush1.bf16.msra.mxu0 %v705
    %1098 = vmatprep.subr.bf16.mxu0 %v710
    %1099 = vmatpush1.bf16.msra.mxu0 %v709
    %1100 = vmatprep.subr.bf16.mxu0 %v714
    %1101 = vmatpush1.bf16.msra.mxu0 %v713
    %1102 = vmatprep.subr.bf16.mxu0 %v718
    %1103 = vmatpush1.bf16.msra.mxu0 %v717
    %1104 = vmatprep.subr.bf16.mxu0 %v722
    %1105 = vmatpush1.bf16.msra.mxu0 %v721
    %1106 = vmatprep.subr.bf16.mxu0 %v726
    %1107 = vmatpush1.bf16.msra.mxu0 %v725
    %1108 = vmatprep.subr.bf16.mxu0 %v730
    %1109 = vmatpush1.bf16.msra.mxu0 %v729
    %1110 = vmatprep.mubr.bf16.mxu0 %v78
    %1111 = vmatmul.mubr.bf16.gmra.mrb[0].mxu0 %v77
    %v1112 = vpop.f32.mrb[0].mxu0
    %v1113 = vadd.f32 %v1040, %v1112
    %v1114 = vpop.f32.mrb[0].mxu0
    %v1115 = vadd.f32 %v1042, %v1114
    %v1116 = vpop.f32.mrb[0].mxu0
    %v1117 = vadd.f32 %v1044, %v1116
    %v1118 = vpop.f32.mrb[0].mxu0
    %v1119 = vadd.f32 %v1046, %v1118
    %1120 = vmatprep.mubr.bf16.mxu0 %v82
    %1121 = vmatmul.mubr.bf16.gmra.mrb[0].mxu0 %v81
    %v1122 = vpop.f32.mrb[0].mxu0
    %v1123 = vadd.f32 %v1050, %v1122
    %v1124 = vpop.f32.mrb[0].mxu0
    %v1125 = vadd.f32 %v1052, %v1124
    %v1126 = vpop.f32.mrb[0].mxu0
    %v1127 = vadd.f32 %v1054, %v1126
    %v1128 = vpop.f32.mrb[0].mxu0
    %v1129 = vadd.f32 %v1056, %v1128
    %1130 = vmatprep.mubr.bf16.mxu0 %v86
    %1131 = vmatmul.mubr.bf16.gmra.mrb[0].mxu0 %v85
    %v1132 = vpop.f32.mrb[0].mxu0
    %v1133 = vadd.f32 %v1060, %v1132
    %v1134 = vpop.f32.mrb[0].mxu0
    %v1135 = vadd.f32 %v1062, %v1134
    %v1136 = vpop.f32.mrb[0].mxu0
    %v1137 = vadd.f32 %v1064, %v1136
    %v1138 = vpop.f32.mrb[0].mxu0
    %v1139 = vadd.f32 %v1066, %v1138
    %1140 = vmatprep.mubr.bf16.mxu0 %v90
    %1141 = vmatmul.mubr.bf16.gmra.mrb[0].mxu0 %v89
    %v1142 = vpop.f32.mrb[0].mxu0
    %v1143 = vadd.f32 %v1070, %v1142
    %v1144 = vpop.f32.mrb[0].mxu0
    %v1145 = vadd.f32 %v1072, %v1144
    %v1146 = vpop.f32.mrb[0].mxu0
    %v1147 = vadd.f32 %v1074, %v1146
    %v1148 = vpop.f32.mrb[0].mxu0
    %v1149 = vadd.f32 %v1076, %v1148
    %1150 = vdwg.mxu0
    %v1151 = vpack.c.bf16 %v971, %v967
    %v1152 = vpack.c.bf16 %v973, %v969
    %v1153 = vpack.c.bf16 %v1117, %v1113
    %v1154 = vpack.c.bf16 %v1119, %v1115
    %v1155 = vpack.c.bf16 %v981, %v977
    %v1156 = vpack.c.bf16 %v983, %v979
    %v1157 = vpack.c.bf16 %v1127, %v1123
    %v1158 = vpack.c.bf16 %v1129, %v1125
    %v1159 = vpack.c.bf16 %v991, %v987
    %v1160 = vpack.c.bf16 %v993, %v989
    %v1161 = vpack.c.bf16 %v1137, %v1133
    %v1162 = vpack.c.bf16 %v1139, %v1135
    %v1163 = vpack.c.bf16 %v1001, %v997
    %v1164 = vpack.c.bf16 %v1003, %v999
    %v1165 = vpack.c.bf16 %v1147, %v1143
    %v1166 = vpack.c.bf16 %v1149, %v1145
    %v1183 = vunpack.c.l.b16 %v1151
    %v1184 = vunpack.c.l.b16 %v1152
    %v1185 = vunpack.c.l.b16 %v1153
    %v1186 = vunpack.c.l.b16 %v1154
    %v1187 = vunpack.c.h.b16 %v1151
    %v1188 = vunpack.c.h.b16 %v1152
    %v1189 = vunpack.c.h.b16 %v1153
    %v1190 = vunpack.c.h.b16 %v1154
    %v1191 = vunpack.c.l.b16 %v1155
    %v1192 = vunpack.c.l.b16 %v1156
    %v1193 = vunpack.c.l.b16 %v1157
    %v1194 = vunpack.c.l.b16 %v1158
    %v1195 = vunpack.c.h.b16 %v1155
    %v1196 = vunpack.c.h.b16 %v1156
    %v1197 = vunpack.c.h.b16 %v1157
    %v1198 = vunpack.c.h.b16 %v1158
    %v1199 = vunpack.c.l.b16 %v1159
    %v1200 = vunpack.c.l.b16 %v1160
    %v1201 = vunpack.c.l.b16 %v1161
    %v1202 = vunpack.c.l.b16 %v1162
    %v1203 = vunpack.c.h.b16 %v1159
    %v1204 = vunpack.c.h.b16 %v1160
    %v1205 = vunpack.c.h.b16 %v1161
    %v1206 = vunpack.c.h.b16 %v1162
    %v1207 = vunpack.c.l.b16 %v1163
    %v1208 = vunpack.c.l.b16 %v1164
    %v1209 = vunpack.c.l.b16 %v1165
    %v1210 = vunpack.c.l.b16 %v1166
    %v1211 = vunpack.c.h.b16 %v1163
    %v1212 = vunpack.c.h.b16 %v1164
    %v1213 = vunpack.c.h.b16 %v1165
    %v1214 = vunpack.c.h.b16 %v1166
    %v1215 = vpack.c.b16 %v1184, %v1183
    %v1216 = vpack.c.b16 %v1186, %v1185
    %v1217 = vpack.c.b16 %v1188, %v1187
    %v1218 = vpack.c.b16 %v1190, %v1189
    %v1219 = vpack.c.b16 %v1192, %v1191
    %v1220 = vpack.c.b16 %v1194, %v1193
    %v1221 = vpack.c.b16 %v1196, %v1195
    %v1222 = vpack.c.b16 %v1198, %v1197
    %v1223 = vpack.c.b16 %v1200, %v1199
    %v1224 = vpack.c.b16 %v1202, %v1201
    %v1225 = vpack.c.b16 %v1204, %v1203
    %v1226 = vpack.c.b16 %v1206, %v1205
    %v1227 = vpack.c.b16 %v1208, %v1207
    %v1228 = vpack.c.b16 %v1210, %v1209
    %v1229 = vpack.c.b16 %v1212, %v1211
    %v1230 = vpack.c.b16 %v1214, %v1213
    %1247 = vst [vmem:[#allocation7] sm:$0xff] %v1215
    %1248 = vst [vmem:[#allocation7 + $0x8] sm:$0xff] %v1216
    %1249 = vst [vmem:[#allocation7 + $0x10] sm:$0xff] %v1217
    %1250 = vst [vmem:[#allocation7 + $0x18] sm:$0xff] %v1218
    %1251 = vst [vmem:[#allocation7 + $0x20] sm:$0xff] %v1219
    %1252 = vst [vmem:[#allocation7 + $0x28] sm:$0xff] %v1220
    %1253 = vst [vmem:[#allocation7 + $0x30] sm:$0xff] %v1221
    %1254 = vst [vmem:[#allocation7 + $0x38] sm:$0xff] %v1222
    %1255 = vst [vmem:[#allocation7 + $0x40] sm:$0xff] %v1223
    %1256 = vst [vmem:[#allocation7 + $0x48] sm:$0xff] %v1224
    %1257 = vst [vmem:[#allocation7 + $0x50] sm:$0xff] %v1225
    %1258 = vst [vmem:[#allocation7 + $0x58] sm:$0xff] %v1226
    %1259 = vst [vmem:[#allocation7 + $0x60] sm:$0xff] %v1227
    %1260 = vst [vmem:[#allocation7 + $0x68] sm:$0xff] %v1228
    %1261 = vst [vmem:[#allocation7 + $0x70] sm:$0xff] %v1229
    %1262 = vst [vmem:[#allocation7 + $0x78] sm:$0xff] %v1230
    %v1263 = vadd.f32 %v967, %v971
    %v1264 = vadd.f32 %v1263, %v977
    %v1265 = vadd.f32 %v1264, %v981
    %v1266 = vadd.f32 %v1265, %v987
    %v1267 = vadd.f32 %v1266, %v991
    %v1268 = vadd.f32 %v1267, %v997
    %v1269 = vadd.f32 %v1268, %v1001
    %v1270 = vrot.slane %v1269, 4
    %v1271 = vadd.f32 %v1269, %v1270
    %v1272 = vrot.slane %v1271, 2
    %v1273 = vadd.f32 %v1271, %v1272
    %v1274 = vrot.slane %v1273, 1
    %v1275 = vadd.f32 %v1273, %v1274
    %v1276 = vadd.f32 %v969, %v973
    %v1277 = vadd.f32 %v1276, %v979
    %v1278 = vadd.f32 %v1277, %v983
    %v1279 = vadd.f32 %v1278, %v989
    %v1280 = vadd.f32 %v1279, %v993
    %v1281 = vadd.f32 %v1280, %v999
    %v1282 = vadd.f32 %v1281, %v1003
    %v1283 = vrot.slane %v1282, 4
    %v1284 = vadd.f32 %v1282, %v1283
    %v1285 = vrot.slane %v1284, 2
    %v1286 = vadd.f32 %v1284, %v1285
    %v1287 = vrot.slane %v1286, 1
    %v1288 = vadd.f32 %v1286, %v1287
    %v1289 = vadd.f32 %v1113, %v1117
    %v1290 = vadd.f32 %v1289, %v1123
    %v1291 = vadd.f32 %v1290, %v1127
    %v1292 = vadd.f32 %v1291, %v1133
    %v1293 = vadd.f32 %v1292, %v1137
    %v1294 = vadd.f32 %v1293, %v1143
    %v1295 = vadd.f32 %v1294, %v1147
    %v1296 = vrot.slane %v1295, 4
    %v1297 = vadd.f32 %v1295, %v1296
    %v1298 = vrot.slane %v1297, 2
    %v1299 = vadd.f32 %v1297, %v1298
    %v1300 = vrot.slane %v1299, 1
    %v1301 = vadd.f32 %v1299, %v1300
    %v1302 = vadd.f32 %v1115, %v1119
    %v1303 = vadd.f32 %v1302, %v1125
    %v1304 = vadd.f32 %v1303, %v1129
    %v1305 = vadd.f32 %v1304, %v1135
    %v1306 = vadd.f32 %v1305, %v1139
    %v1307 = vadd.f32 %v1306, %v1145
    %v1308 = vadd.f32 %v1307, %v1149
    %v1309 = vrot.slane %v1308, 4
    %v1310 = vadd.f32 %v1308, %v1309
    %v1311 = vrot.slane %v1310, 2
    %v1312 = vadd.f32 %v1310, %v1311
    %v1313 = vrot.slane %v1312, 1
    %v1314 = vadd.f32 %v1312, %v1313
    %v1315 = vmul.f32 %v967, %v967
    %v1316 = vmul.f32 %v969, %v969
    %v1317 = vmul.f32 %v1113, %v1113
    %v1318 = vmul.f32 %v1115, %v1115
    %v1319 = vmul.f32 %v971, %v971
    %v1320 = vmul.f32 %v973, %v973
    %v1321 = vmul.f32 %v1117, %v1117
    %v1322 = vmul.f32 %v1119, %v1119
    %v1323 = vmul.f32 %v977, %v977
    %v1324 = vmul.f32 %v979, %v979
    %v1325 = vmul.f32 %v1123, %v1123
    %v1326 = vmul.f32 %v1125, %v1125
    %v1327 = vmul.f32 %v981, %v981
    %v1328 = vmul.f32 %v983, %v983
    %v1329 = vmul.f32 %v1127, %v1127
    %v1330 = vmul.f32 %v1129, %v1129
    %v1331 = vmul.f32 %v987, %v987
    %v1332 = vmul.f32 %v989, %v989
    %v1333 = vmul.f32 %v1133, %v1133
    %v1334 = vmul.f32 %v1135, %v1135
    %v1335 = vmul.f32 %v991, %v991
    %v1336 = vmul.f32 %v993, %v993
    %v1337 = vmul.f32 %v1137, %v1137
    %v1338 = vmul.f32 %v1139, %v1139
    %v1339 = vmul.f32 %v997, %v997
    %v1340 = vmul.f32 %v999, %v999
    %v1341 = vmul.f32 %v1143, %v1143
    %v1342 = vmul.f32 %v1145, %v1145
    %v1343 = vmul.f32 %v1001, %v1001
    %v1344 = vmul.f32 %v1003, %v1003
    %v1345 = vmul.f32 %v1147, %v1147
    %v1346 = vmul.f32 %v1149, %v1149
    %v1347 = vadd.f32 %v1315, %v1319
    %v1348 = vadd.f32 %v1347, %v1323
    %v1349 = vadd.f32 %v1348, %v1327
    %v1350 = vadd.f32 %v1349, %v1331
    %v1351 = vadd.f32 %v1350, %v1335
    %v1352 = vadd.f32 %v1351, %v1339
    %v1353 = vadd.f32 %v1352, %v1343
    %v1354 = vrot.slane %v1353, 4
    %v1355 = vadd.f32 %v1353, %v1354
    %v1356 = vrot.slane %v1355, 2
    %v1357 = vadd.f32 %v1355, %v1356
    %v1358 = vrot.slane %v1357, 1
    %v1359 = vadd.f32 %v1357, %v1358
    %v1360 = vadd.f32 %v1316, %v1320
    %v1361 = vadd.f32 %v1360, %v1324
    %v1362 = vadd.f32 %v1361, %v1328
    %v1363 = vadd.f32 %v1362, %v1332
    %v1364 = vadd.f32 %v1363, %v1336
    %v1365 = vadd.f32 %v1364, %v1340
    %v1366 = vadd.f32 %v1365, %v1344
    %v1367 = vrot.slane %v1366, 4
    %v1368 = vadd.f32 %v1366, %v1367
    %v1369 = vrot.slane %v1368, 2
    %v1370 = vadd.f32 %v1368, %v1369
    %v1371 = vrot.slane %v1370, 1
    %v1372 = vadd.f32 %v1370, %v1371
    %v1373 = vadd.f32 %v1317, %v1321
    %v1374 = vadd.f32 %v1373, %v1325
    %v1375 = vadd.f32 %v1374, %v1329
    %v1376 = vadd.f32 %v1375, %v1333
    %v1377 = vadd.f32 %v1376, %v1337
    %v1378 = vadd.f32 %v1377, %v1341
    %v1379 = vadd.f32 %v1378, %v1345
    %v1380 = vrot.slane %v1379, 4
    %v1381 = vadd.f32 %v1379, %v1380
    %v1382 = vrot.slane %v1381, 2
    %v1383 = vadd.f32 %v1381, %v1382
    %v1384 = vrot.slane %v1383, 1
    %v1385 = vadd.f32 %v1383, %v1384
    %v1386 = vadd.f32 %v1318, %v1322
    %v1387 = vadd.f32 %v1386, %v1326
    %v1388 = vadd.f32 %v1387, %v1330
    %v1389 = vadd.f32 %v1388, %v1334
    %v1390 = vadd.f32 %v1389, %v1338
    %v1391 = vadd.f32 %v1390, %v1342
    %v1392 = vadd.f32 %v1391, %v1346
    %v1393 = vrot.slane %v1392, 4
    %v1394 = vadd.f32 %v1392, %v1393
    %v1395 = vrot.slane %v1394, 2
    %v1396 = vadd.f32 %v1394, %v1395
    %v1397 = vrot.slane %v1396, 1
    %v1398 = vadd.f32 %v1396, %v1397
    %vm1399 = vcmask 1040384
    %v1400 = vsel %vm1399, %v1275, %v1359
    %v1401 = vsel %vm1399, %v1288, %v1372
    %v1402 = vsel %vm1399, %v1301, %v1385
    %v1403 = vsel %vm1399, %v1314, %v1398
    %vm1404 = vcmask 1041408
    %v1405 = vsel %vm1404, %v1400, 0.0
    %v1406 = vsel %vm1404, %v1401, 0.0
    %v1407 = vsel %vm1404, %v1402, 0.0
    %v1408 = vsel %vm1404, %v1403, 0.0
    %1409 = vst [vmem:[#allocation8] sm:$0xff] %v1405
    %1410 = vst [vmem:[#allocation8 + $0x8] sm:$0xff] %v1406
    %1411 = vst [vmem:[#allocation8 + $0x10] sm:$0xff] %v1407
    %1412 = vst [vmem:[#allocation8 + $0x18] sm:$0xff] %v1408
    // Predicated region
    $region18: #{tpu_custom_call.1} parent=1 // pred_check
      _
    $region19: #{tpu_custom_call.1} parent=1 // pred_check_branch
      %1414 = sbr.rel (0) target = $region21
    $region20: #{tpu_custom_call.1} parent=1 // pred_region
      %s1416 = ssub.s32 2048, 2048
      %1417 = vsyncadd [#allocation4], %s1416
      %s1418 = sshll.u32 [#allocation7], 4
      %s1419 = int_to_ptr.vmem [resolvable:$true] %s1418
      %1424 = dma.vmem_to_hbm [thread:$0]  %s1419, 2048, %s2, [#allocation4], 256, 256, 16
    $region21: #{tpu_custom_call.1} parent=1 // pred_fallthru
      _
    // Predicated region
    $region22: #{tpu_custom_call.1} parent=1 // pred_check
      _
    $region23: #{tpu_custom_call.1} parent=1 // pred_check_branch
      %1426 = sbr.rel (0) target = $region25
    $region24: #{tpu_custom_call.1} parent=1 // pred_region
      %s1428 = ssub.s32 512, 512
      %1429 = vsyncadd [#allocation9], %s1428
      %s1431 = sshll.u32 [#allocation8], 4
      %s1432 = int_to_ptr.vmem [resolvable:$true] %s1431
      %1434 = dma.vmem_to_hbm [thread:$0]  %s1432, 512, %s3, [#allocation9]
    $region25: #{tpu_custom_call.1} parent=1 // pred_fallthru
      _
    // Predicated region
    $region26: #{tpu_custom_call.1} parent=1 // pred_check
      _
    $region27: #{tpu_custom_call.1} parent=1 // pred_check_branch
      %1436 = sbr.rel (0) target = $region29
    $region28: #{tpu_custom_call.1} parent=1 // pred_region
      %1437 = dma.done [#allocation4], 2048
    $region29: #{tpu_custom_call.1} parent=1 // pred_fallthru
      _
    // Predicated region
    $region30: #{tpu_custom_call.1} parent=1 // pred_check
      _
    $region31: #{tpu_custom_call.1} parent=1 // pred_check_branch
      %1439 = sbr.rel (0) target = $region33
    $region32: #{tpu_custom_call.1} parent=1 // pred_region
      %1440 = dma.done [#allocation9], 512
    $region33: #{tpu_custom_call.1} parent=1 // pred_fallthru
      _
    %1441 = vsyncpa [#allocation3], 1
    %1442 = vsyncpa [#allocation6], 1
    %1443 = vsyncpa [#allocation4], 1
    %1444 = vsyncpa [#allocation9], 1

</llo_original>
